<compile_context>
chip_gen: v7x
topology: tpu7x:2x2x1
jax: 0.10.0
libtpu: 0.0.40
codegen_flags: <defaults>
</compile_context>

<pallas_src>
import math
import functools

import jax
import jax.numpy as jnp
import numpy as np
from jax.experimental import pallas as pl
from jax.experimental.pallas import tpu as pltpu


# ---------------------------------------------------------------------------
# Fused kernel: last-token gather + ArcFace (train) + CE / BCE losses
# grid = (C // TILE_C,)  — class-tile axis, "arbitrary" (loss accumulates over it)
# ---------------------------------------------------------------------------
def _fused_kernel(
    idx_ref,        # scalar prefetch, SMEM int32 [B_pad]  (last-token index per row)
    hidden_hbm,     # pl.ANY  [B, S, H]  (backbone hidden states, stays in HBM)
    labels_ref,     # VMEM    [B_pad, TILE_C]
    wt_ref,         # VMEM    [H, TILE_C]      (ArcFace weight, stored as W^T)
    emb_ref,        # out VMEM [B_pad, H]      (pooled embeddings)
    logits_ref,     # out VMEM [B_pad, TILE_C]
    ce_ref,         # out SMEM (1, 1)
    bce_ref,        # out SMEM (1, 1)
    emb_sc,         # VMEM [B_pad, H]  gathered last-token rows
    xn_sc,          # VMEM [B_pad, H]  bf16 normalized embeddings (MXU lhs, reused per tile)
    m_sc,           # VMEM [B_pad, 1]  running max (online softmax)
    se_sc,          # VMEM [B_pad, 1]  running sum(exp)
    yx_sc,          # VMEM [B_pad, 1]  running sum(y * logit)
    ysum_sc,        # VMEM [B_pad, 1]  running sum(y)
    bce_sc,         # VMEM [B_pad, 1]  running per-row BCE sums
    copy_sem,       # DMA semaphores (B_pad,)
    *, s, cos_m, sin_m, th, mm, b_real, n_classes,
):
    j = pl.program_id(0)
    b_pad = emb_sc.shape[0]

    # ---------------- first class tile: gather rows, normalize, init accumulators
    @pl.when(j == 0)
    def _init():
        copies = []
        for b in range(b_pad):                       # static, tiny loop
            src_b = b if b < b_real else 0           # padded rows gather a valid row
            tok = idx_ref[b]
            cp = pltpu.make_async_copy(
                hidden_hbm.at[src_b, pl.ds(tok, 1), :],   # [1, H] row in HBM
                emb_sc.at[pl.ds(b, 1), :],                # [1, H] row in VMEM
                copy_sem.at[b],
            )
            cp.start()
            copies.append(cp)
        for cp in copies:
            cp.wait()

        emb = emb_sc[...].astype(jnp.float32)                          # [B_pad, H]
        emb_ref[...] = emb.astype(emb_ref.dtype)
        # F.normalize(x): x / max(||x||, eps)  ==  x * rsqrt(max(||x||^2, eps^2))
        inv_n = jax.lax.rsqrt(
            jnp.maximum(jnp.sum(emb * emb, axis=1, keepdims=True), 1e-24))
        xn_sc[...] = (emb * inv_n).astype(xn_sc.dtype)                 # bf16 MXU lhs

        m_sc[...] = jnp.full(m_sc.shape, -1e30, m_sc.dtype)
        se_sc[...] = jnp.zeros(se_sc.shape, se_sc.dtype)
        yx_sc[...] = jnp.zeros(yx_sc.shape, yx_sc.dtype)
        ysum_sc[...] = jnp.zeros(ysum_sc.shape, ysum_sc.dtype)
        bce_sc[...] = jnp.zeros(bce_sc.shape, bce_sc.dtype)

    # ---------------- per class tile: ArcFace logits + loss accumulation
    y = labels_ref[...].astype(jnp.float32)                            # [B_pad, Tc]
    w = wt_ref[...].astype(jnp.float32)                                # [H, Tc]
    inv_w = jax.lax.rsqrt(
        jnp.maximum(jnp.sum(w * w, axis=0, keepdims=True), 1e-24))
    wn = (w * inv_w).astype(jnp.bfloat16)                              # [H, Tc] bf16
    xn = xn_sc[...]                                                    # [B_pad, H] bf16

    cosine = jnp.dot(xn, wn, preferred_element_type=jnp.float32)       # [B_pad, Tc]
    sine = jnp.sqrt(jnp.clip(1.0 - cosine * cosine, 0.0, 1.0))
    phi = cosine * cos_m - sine * sin_m
    phi = jnp.where(cosine > th, phi, cosine - mm)                     # easy_margin=False
    logit = s * (y * phi + (1.0 - y) * cosine)
    logits_ref[...] = logit.astype(logits_ref.dtype)

    # online log-sum-exp across class tiles (CE)
    m_old = m_sc[...]
    m_new = jnp.maximum(m_old, jnp.max(logit, axis=1, keepdims=True))
    se_sc[...] = (se_sc[...] * jnp.exp(m_old - m_new)
                  + jnp.sum(jnp.exp(logit - m_new), axis=1, keepdims=True))
    m_sc[...] = m_new
    yx_sc[...] = yx_sc[...] + jnp.sum(y * logit, axis=1, keepdims=True)
    ysum_sc[...] = ysum_sc[...] + jnp.sum(y, axis=1, keepdims=True)

    # BCE-with-logits, per-row partial sums
    e = jnp.exp(-jnp.abs(logit))
    bce_sc[...] = bce_sc[...] + jnp.sum(
        jnp.maximum(logit, 0.0) - logit * y + jnp.log1p(e),
        axis=1, keepdims=True)

    # ---------------- last class tile: reduce to the two scalar losses
    @pl.when(j == pl.num_programs(0) - 1)
    def _fin():
        row_valid = jax.lax.broadcasted_iota(jnp.int32, (b_pad, 1), 0) < b_real
        lse = m_sc[...] + jnp.log(se_sc[...])                          # [B_pad, 1]
        ce_rows = -yx_sc[...] + ysum_sc[...] * lse
        ce_total = jnp.sum(jnp.where(row_valid, ce_rows, 0.0))
        bce_total = jnp.sum(jnp.where(row_valid, bce_sc[...], 0.0))
        ce_ref[0, 0] = ce_total * (1.0 / b_real)
        bce_ref[0, 0] = bce_total * (1.0 / (b_real * n_classes))


def eedi_cls_v3_train_fused(hidden, attention_mask, labels, arc_w_t, *, s, m):
    """hidden: [B,S,H] backbone output, labels: [B,C] one-hot, arc_w_t: [H,C]."""
    B, S, H = hidden.shape
    Ht, C = arc_w_t.shape
    assert Ht == H

    # --- last-token index per row (cheap scalar math; matches torch last_token_pool)
    mask = attention_mask.astype(jnp.int32)
    left_padding = jnp.sum(mask[:, -1]) == B
    seq_len = jnp.sum(mask, axis=1) - 1
    idx = jnp.where(left_padding, S - 1, seq_len)
    # all-zero mask row: torch gathers index -1 == last token; replicate that.
    idx = jnp.where(idx < 0, S - 1, idx).astype(jnp.int32)

    # --- pad batch to a multiple of 8 sublanes (padded rows masked out of losses)
    b_pad = max(8, ((B + 7) // 8) * 8)
    pad_b = b_pad - B
    idx_p = jnp.pad(idx, (0, pad_b))
    labels_p = jnp.pad(labels.astype(jnp.float32), ((0, pad_b), (0, 0)))

    tile_c = 256 if C % 256 == 0 else (128 if C % 128 == 0 else C)
    grid = (C // tile_c,)

    cos_m, sin_m = math.cos(m), math.sin(m)
    th, mm = math.cos(math.pi - m), math.sin(math.pi - m) * m
    kern = functools.partial(
        _fused_kernel, s=float(s), cos_m=cos_m, sin_m=sin_m, th=th, mm=mm,
        b_real=B, n_classes=C)

    emb_p, logits_p, ce, bce = pl.pallas_call(
        kern,
        grid_spec=pltpu.PrefetchScalarGridSpec(
            num_scalar_prefetch=1,
            grid=grid,
            in_specs=[
                pl.BlockSpec(memory_space=pl.ANY),                         # hidden (HBM)
                pl.BlockSpec((b_pad, tile_c), lambda j, idx_ref: (0, j)),  # labels
                pl.BlockSpec((H, tile_c), lambda j, idx_ref: (0, j)),      # W^T tile
            ],
            out_specs=[
                pl.BlockSpec((b_pad, H), lambda j, idx_ref: (0, 0)),       # embeddings
                pl.BlockSpec((b_pad, tile_c), lambda j, idx_ref: (0, j)),  # logits
                pl.BlockSpec(memory_space=pltpu.SMEM),                     # CE scalar
                pl.BlockSpec(memory_space=pltpu.SMEM),                     # BCE scalar
            ],
            scratch_shapes=[
                pltpu.VMEM((b_pad, H), hidden.dtype),     # gathered rows
                pltpu.VMEM((b_pad, H), jnp.bfloat16),     # normalized emb (MXU lhs)
                pltpu.VMEM((b_pad, 1), jnp.float32),      # running max
                pltpu.VMEM((b_pad, 1), jnp.float32),      # running sum exp
                pltpu.VMEM((b_pad, 1), jnp.float32),      # sum(y * logit)
                pltpu.VMEM((b_pad, 1), jnp.float32),      # sum(y)
                pltpu.VMEM((b_pad, 1), jnp.float32),      # per-row BCE sums
                pltpu.SemaphoreType.DMA((b_pad,)),
            ],
        ),
        out_shape=[
            jax.ShapeDtypeStruct((b_pad, H), jnp.float32),
            jax.ShapeDtypeStruct((b_pad, C), jnp.float32),
            jax.ShapeDtypeStruct((1, 1), jnp.float32),
            jax.ShapeDtypeStruct((1, 1), jnp.float32),
        ],
        compiler_params=pltpu.CompilerParams(
            dimension_semantics=("arbitrary",)),   # C axis carries loss accumulators
    )(idx_p, hidden, labels_p, arc_w_t)

    return emb_p[:B], logits_p[:B], ce[0, 0], bce[0, 0]


# ---------------------------------------------------------------------------
# Model (synthetic parameters) + forward_train wrapper
# ---------------------------------------------------------------------------
def init_params(key, *, vocab, hidden, num_classes):
    k1, k2, k3 = jax.random.split(key, 3)
    # TODO(synk): real module uses a pretrained 4-bit quantized LLM2Vec/Mistral
    # backbone; replaced here by a synthetic embedding table + tanh projection.
    emb_table = jax.random.normal(k1, (vocab, hidden), jnp.float32) * 0.02
    w_proj = jax.random.normal(k2, (hidden, hidden), jnp.float32) * (1.0 / math.sqrt(hidden))
    # ArcFace weight, xavier_uniform_ on [num_classes, hidden]; stored pre-transposed
    # as [hidden, num_classes] (== weight.T) so the kernel contracts (B,H)x(H,C)
    # with the class axis lane-dense on the output.
    limit = math.sqrt(6.0 / (num_classes + hidden))
    arc_w_t = jax.random.uniform(k3, (hidden, num_classes), jnp.float32, -limit, limit)
    return dict(emb_table=emb_table, w_proj=w_proj, arc_w_t=arc_w_t)


def backbone_stub(params, input_ids):
    h = jnp.take(params["emb_table"], input_ids, axis=0)        # [B, S, H]
    return jnp.tanh(h @ params["w_proj"])                       # [B, S, H]


def eedi_cls_v3_forward_train(params, input_ids, attention_mask, labels, *, s, m):
    last_hidden_state = backbone_stub(params, input_ids)        # plain-JAX glue
    emb, logits, ce, bce = eedi_cls_v3_train_fused(
        last_hidden_state, attention_mask, labels, params["arc_w_t"], s=s, m=m)
    return {
        "cls_loss": ce,
        "cls_loss2": bce,
        "seq_loss": jnp.float32(-1.0),
        "outputs": None,
        "logits": logits,
        "embeddings": emb,
    }


# ---------------------------------------------------------------------------
# Pure-JAX reference (for correctness check only; uses the same bf16 MXU inputs
# for the cosine matmul as the kernel)
# ---------------------------------------------------------------------------
def _reference(hidden, attention_mask, labels, arc_w_t, *, s, m):
    mask = attention_mask.astype(jnp.int32)
    B, S, H = hidden.shape
    left_pad = jnp.sum(mask[:, -1]) == B
    seq_len = jnp.sum(mask, axis=1) - 1
    idx = jnp.where(left_pad, S - 1, seq_len)
    idx = jnp.where(idx < 0, S - 1, idx)
    emb = hidden[jnp.arange(B), idx]
    xn = emb * jax.lax.rsqrt(jnp.maximum(jnp.sum(emb * emb, axis=1, keepdims=True), 1e-24))
    wn = arc_w_t * jax.lax.rsqrt(
        jnp.maximum(jnp.sum(arc_w_t * arc_w_t, axis=0, keepdims=True), 1e-24))
    cosine = jnp.dot(xn.astype(jnp.bfloat16), wn.astype(jnp.bfloat16),
                     preferred_element_type=jnp.float32)
    sine = jnp.sqrt(jnp.clip(1.0 - cosine ** 2, 0.0, 1.0))
    cos_m, sin_m = math.cos(m), math.sin(m)
    th, mm = math.cos(math.pi - m), math.sin(math.pi - m) * m
    phi = cosine * cos_m - sine * sin_m
    phi = jnp.where(cosine > th, phi, cosine - mm)
    logits = s * (labels * phi + (1.0 - labels) * cosine)
    logp = jax.nn.log_softmax(logits, axis=-1)
    ce = -jnp.mean(jnp.sum(labels * logp, axis=-1))
    bce = jnp.mean(jnp.maximum(logits, 0.0) - logits * labels
                   + jnp.log1p(jnp.exp(-jnp.abs(logits))))
    return emb, logits, ce, bce


# ---------------------------------------------------------------------------
if __name__ == "__main__":
    B, S, H, C, VOCAB = 4, 8, 128, 128, 64
    S_SCALE, MARGIN = 30.0, 0.5

    key = jax.random.PRNGKey(0)
    kp, ki, kl = jax.random.split(key, 3)

    params = init_params(kp, vocab=VOCAB, hidden=H, num_classes=C)

    input_ids = jax.random.randint(ki, (B, S), 0, VOCAB, dtype=jnp.int32)
    lengths = jnp.array([8, 5, 8, 3], dtype=jnp.int32)           # right padding
    attention_mask = (jnp.arange(S)[None, :] < lengths[:, None]).astype(jnp.int32)
    label_ids = jax.random.randint(kl, (B,), 0, C, dtype=jnp.int32)
    labels = jax.nn.one_hot(label_ids, C, dtype=jnp.float32)

    out = eedi_cls_v3_forward_train(
        params, input_ids, attention_mask, labels, s=S_SCALE, m=MARGIN)
    jax.block_until_ready(out["logits"])

    # correctness check against pure-JAX reference (same backbone stub output)
    hidden = backbone_stub(params, input_ids)
    ref_emb, ref_logits, ref_ce, ref_bce = _reference(
        hidden, attention_mask, labels, params["arc_w_t"], s=S_SCALE, m=MARGIN)

    np.testing.assert_allclose(np.asarray(out["embeddings"]), np.asarray(ref_emb),
                               rtol=1e-5, atol=1e-5)
    np.testing.assert_allclose(np.asarray(out["logits"]), np.asarray(ref_logits),
                               rtol=1e-2, atol=1e-2)
    np.testing.assert_allclose(float(out["cls_loss"]), float(ref_ce),
                               rtol=1e-2, atol=1e-2)
    np.testing.assert_allclose(float(out["cls_loss2"]), float(ref_bce),
                               rtol=1e-2, atol=1e-2)

    print("KERNEL_OK")
</pallas_src>

<mosaic_0001>
module attributes {stable_mosaic.version = 11 : i64} {
  func.func @_fused_kernel(%arg0: i32, %arg1: memref<8xi32, #tpu.memory_space<smem>>, %arg2: memref<4x8x128xf32, #tpu.memory_space<any>>, %arg3: memref<8x128xf32, #tpu.memory_space<vmem>>, %arg4: memref<128x128xf32, #tpu.memory_space<vmem>>, %arg5: memref<8x128xf32, #tpu.memory_space<vmem>>, %arg6: memref<8x128xf32, #tpu.memory_space<vmem>>, %arg7: memref<1x1xf32, #tpu.memory_space<smem>>, %arg8: memref<1x1xf32, #tpu.memory_space<smem>>, %arg9: memref<8x128xf32, #tpu.memory_space<vmem>>, %arg10: memref<8x128xbf16, #tpu.memory_space<vmem>>, %arg11: memref<8x1xf32, #tpu.memory_space<vmem>>, %arg12: memref<8x1xf32, #tpu.memory_space<vmem>>, %arg13: memref<8x1xf32, #tpu.memory_space<vmem>>, %arg14: memref<8x1xf32, #tpu.memory_space<vmem>>, %arg15: memref<8x1xf32, #tpu.memory_space<vmem>>, %arg16: memref<8x!tpu.dma_semaphore, #tpu.memory_space<semaphore_mem>>) attributes {dimension_semantics = [#tpu.dimension_semantics<arbitrary>], iteration_bounds = array<i64: 1>, scalar_prefetch = 1 : i64, scratch_operands = 8 : i64, tpu.core_type = #tpu.core_type<tc>, window_params = [{}, {transform_indices = @transform_1, window_bounds = array<i64: 8, 128>}, {transform_indices = @transform_2, window_bounds = array<i64: 128, 128>}, {pipeline_mode = #tpu.pipeline_mode<synchronous>, transform_indices = @transform_3, window_bounds = array<i64: 8, 128>}, {transform_indices = @transform_4, window_bounds = array<i64: 8, 128>}, {transform_indices = @transform_5, window_bounds = array<i64: 1, 1>}, {transform_indices = @transform_6, window_bounds = array<i64: 1, 1>}]} {
    %c0_i32 = arith.constant 0 : i32
    %0 = arith.cmpi eq, %arg0, %c0_i32 : i32
    %1 = arith.extui %0 : i1 to i32
    %c0_i32_0 = arith.constant 0 : i32
    %2 = arith.cmpi ne, %1, %c0_i32_0 : i32
    scf.if %2 {
      %c0_48 = arith.constant 0 : index
      %87 = memref.load %arg1[%c0_48] : memref<8xi32, #tpu.memory_space<smem>>
      %c0_i32_49 = arith.constant 0 : i32
      %c0_i32_50 = arith.constant 0 : i32
      %c0_i32_51 = arith.constant 0 : i32
      %88 = tpu.memref_slice %arg2[%c0_i32_49, %87, %c0_i32_51] : memref<4x8x128xf32, #tpu.memory_space<any>> -> memref<1x1x128xf32, #tpu.memory_space<any>>
      %89 = tpu.memref_squeeze %88 : memref<1x1x128xf32, #tpu.memory_space<any>> -> memref<1x128xf32, #tpu.memory_space<any>>
      %c0_i32_52 = arith.constant 0 : i32
      %c0_i32_53 = arith.constant 0 : i32
      %90 = tpu.memref_slice %arg9[%c0_i32_52, %c0_i32_53] : memref<8x128xf32, #tpu.memory_space<vmem>> -> memref<1x128xf32, #tpu.memory_space<vmem>>
      %91 = tpu.memref_slice %arg16[%c0_i32_50] : memref<8x!tpu.dma_semaphore, #tpu.memory_space<semaphore_mem>> -> memref<1x!tpu.dma_semaphore, #tpu.memory_space<semaphore_mem>>
      %92 = tpu.memref_squeeze %91 : memref<1x!tpu.dma_semaphore, #tpu.memory_space<semaphore_mem>> -> memref<!tpu.dma_semaphore, #tpu.memory_space<semaphore_mem>>
      tpu.enqueue_dma source(%89 : memref<1x128xf32, #tpu.memory_space<any>>) target(%90 : memref<1x128xf32, #tpu.memory_space<vmem>>) target_semaphore(%92 : memref<!tpu.dma_semaphore, #tpu.memory_space<semaphore_mem>>)
      %c1 = arith.constant 1 : index
      %93 = memref.load %arg1[%c1] : memref<8xi32, #tpu.memory_space<smem>>
      %c1_i32 = arith.constant 1 : i32
      %c1_i32_54 = arith.constant 1 : i32
      %c0_i32_55 = arith.constant 0 : i32
      %94 = tpu.memref_slice %arg2[%c1_i32, %93, %c0_i32_55] : memref<4x8x128xf32, #tpu.memory_space<any>> -> memref<1x1x128xf32, #tpu.memory_space<any>>
      %95 = tpu.memref_squeeze %94 : memref<1x1x128xf32, #tpu.memory_space<any>> -> memref<1x128xf32, #tpu.memory_space<any>>
      %c1_i32_56 = arith.constant 1 : i32
      %c0_i32_57 = arith.constant 0 : i32
      %96 = tpu.memref_slice %arg9[%c1_i32_56, %c0_i32_57] : memref<8x128xf32, #tpu.memory_space<vmem>> -> memref<1x128xf32, #tpu.memory_space<vmem>>
      %97 = tpu.memref_slice %arg16[%c1_i32_54] : memref<8x!tpu.dma_semaphore, #tpu.memory_space<semaphore_mem>> -> memref<1x!tpu.dma_semaphore, #tpu.memory_space<semaphore_mem>>
      %98 = tpu.memref_squeeze %97 : memref<1x!tpu.dma_semaphore, #tpu.memory_space<semaphore_mem>> -> memref<!tpu.dma_semaphore, #tpu.memory_space<semaphore_mem>>
      tpu.enqueue_dma source(%95 : memref<1x128xf32, #tpu.memory_space<any>>) target(%96 : memref<1x128xf32, #tpu.memory_space<vmem>>) target_semaphore(%98 : memref<!tpu.dma_semaphore, #tpu.memory_space<semaphore_mem>>)
      %c2 = arith.constant 2 : index
      %99 = memref.load %arg1[%c2] : memref<8xi32, #tpu.memory_space<smem>>
      %c2_i32 = arith.constant 2 : i32
      %c2_i32_58 = arith.constant 2 : i32
      %c0_i32_59 = arith.constant 0 : i32
      %100 = tpu.memref_slice %arg2[%c2_i32, %99, %c0_i32_59] : memref<4x8x128xf32, #tpu.memory_space<any>> -> memref<1x1x128xf32, #tpu.memory_space<any>>
      %101 = tpu.memref_squeeze %100 : memref<1x1x128xf32, #tpu.memory_space<any>> -> memref<1x128xf32, #tpu.memory_space<any>>
      %c2_i32_60 = arith.constant 2 : i32
      %c0_i32_61 = arith.constant 0 : i32
      %102 = tpu.memref_slice %arg9[%c2_i32_60, %c0_i32_61] : memref<8x128xf32, #tpu.memory_space<vmem>> -> memref<1x128xf32, #tpu.memory_space<vmem>>
      %103 = tpu.memref_slice %arg16[%c2_i32_58] : memref<8x!tpu.dma_semaphore, #tpu.memory_space<semaphore_mem>> -> memref<1x!tpu.dma_semaphore, #tpu.memory_space<semaphore_mem>>
      %104 = tpu.memref_squeeze %103 : memref<1x!tpu.dma_semaphore, #tpu.memory_space<semaphore_mem>> -> memref<!tpu.dma_semaphore, #tpu.memory_space<semaphore_mem>>
      tpu.enqueue_dma source(%101 : memref<1x128xf32, #tpu.memory_space<any>>) target(%102 : memref<1x128xf32, #tpu.memory_space<vmem>>) target_semaphore(%104 : memref<!tpu.dma_semaphore, #tpu.memory_space<semaphore_mem>>)
      %c3 = arith.constant 3 : index
      %105 = memref.load %arg1[%c3] : memref<8xi32, #tpu.memory_space<smem>>
      %c3_i32 = arith.constant 3 : i32
      %c3_i32_62 = arith.constant 3 : i32
      %c0_i32_63 = arith.constant 0 : i32
      %106 = tpu.memref_slice %arg2[%c3_i32, %105, %c0_i32_63] : memref<4x8x128xf32, #tpu.memory_space<any>> -> memref<1x1x128xf32, #tpu.memory_space<any>>
      %107 = tpu.memref_squeeze %106 : memref<1x1x128xf32, #tpu.memory_space<any>> -> memref<1x128xf32, #tpu.memory_space<any>>
      %c3_i32_64 = arith.constant 3 : i32
      %c0_i32_65 = arith.constant 0 : i32
      %108 = tpu.memref_slice %arg9[%c3_i32_64, %c0_i32_65] : memref<8x128xf32, #tpu.memory_space<vmem>> -> memref<1x128xf32, #tpu.memory_space<vmem>>
      %109 = tpu.memref_slice %arg16[%c3_i32_62] : memref<8x!tpu.dma_semaphore, #tpu.memory_space<semaphore_mem>> -> memref<1x!tpu.dma_semaphore, #tpu.memory_space<semaphore_mem>>
      %110 = tpu.memref_squeeze %109 : memref<1x!tpu.dma_semaphore, #tpu.memory_space<semaphore_mem>> -> memref<!tpu.dma_semaphore, #tpu.memory_space<semaphore_mem>>
      tpu.enqueue_dma source(%107 : memref<1x128xf32, #tpu.memory_space<any>>) target(%108 : memref<1x128xf32, #tpu.memory_space<vmem>>) target_semaphore(%110 : memref<!tpu.dma_semaphore, #tpu.memory_space<semaphore_mem>>)
      %c4 = arith.constant 4 : index
      %111 = memref.load %arg1[%c4] : memref<8xi32, #tpu.memory_space<smem>>
      %c0_i32_66 = arith.constant 0 : i32
      %c4_i32 = arith.constant 4 : i32
      %c0_i32_67 = arith.constant 0 : i32
      %112 = tpu.memref_slice %arg2[%c0_i32_66, %111, %c0_i32_67] : memref<4x8x128xf32, #tpu.memory_space<any>> -> memref<1x1x128xf32, #tpu.memory_space<any>>
      %113 = tpu.memref_squeeze %112 : memref<1x1x128xf32, #tpu.memory_space<any>> -> memref<1x128xf32, #tpu.memory_space<any>>
      %c4_i32_68 = arith.constant 4 : i32
      %c0_i32_69 = arith.constant 0 : i32
      %114 = tpu.memref_slice %arg9[%c4_i32_68, %c0_i32_69] : memref<8x128xf32, #tpu.memory_space<vmem>> -> memref<1x128xf32, #tpu.memory_space<vmem>>
      %115 = tpu.memref_slice %arg16[%c4_i32] : memref<8x!tpu.dma_semaphore, #tpu.memory_space<semaphore_mem>> -> memref<1x!tpu.dma_semaphore, #tpu.memory_space<semaphore_mem>>
      %116 = tpu.memref_squeeze %115 : memref<1x!tpu.dma_semaphore, #tpu.memory_space<semaphore_mem>> -> memref<!tpu.dma_semaphore, #tpu.memory_space<semaphore_mem>>
      tpu.enqueue_dma source(%113 : memref<1x128xf32, #tpu.memory_space<any>>) target(%114 : memref<1x128xf32, #tpu.memory_space<vmem>>) target_semaphore(%116 : memref<!tpu.dma_semaphore, #tpu.memory_space<semaphore_mem>>)
      %c5 = arith.constant 5 : index
      %117 = memref.load %arg1[%c5] : memref<8xi32, #tpu.memory_space<smem>>
      %c0_i32_70 = arith.constant 0 : i32
      %c5_i32 = arith.constant 5 : i32
      %c0_i32_71 = arith.constant 0 : i32
      %118 = tpu.memref_slice %arg2[%c0_i32_70, %117, %c0_i32_71] : memref<4x8x128xf32, #tpu.memory_space<any>> -> memref<1x1x128xf32, #tpu.memory_space<any>>
      %119 = tpu.memref_squeeze %118 : memref<1x1x128xf32, #tpu.memory_space<any>> -> memref<1x128xf32, #tpu.memory_space<any>>
      %c5_i32_72 = arith.constant 5 : i32
      %c0_i32_73 = arith.constant 0 : i32
      %120 = tpu.memref_slice %arg9[%c5_i32_72, %c0_i32_73] : memref<8x128xf32, #tpu.memory_space<vmem>> -> memref<1x128xf32, #tpu.memory_space<vmem>>
      %121 = tpu.memref_slice %arg16[%c5_i32] : memref<8x!tpu.dma_semaphore, #tpu.memory_space<semaphore_mem>> -> memref<1x!tpu.dma_semaphore, #tpu.memory_space<semaphore_mem>>
      %122 = tpu.memref_squeeze %121 : memref<1x!tpu.dma_semaphore, #tpu.memory_space<semaphore_mem>> -> memref<!tpu.dma_semaphore, #tpu.memory_space<semaphore_mem>>
      tpu.enqueue_dma source(%119 : memref<1x128xf32, #tpu.memory_space<any>>) target(%120 : memref<1x128xf32, #tpu.memory_space<vmem>>) target_semaphore(%122 : memref<!tpu.dma_semaphore, #tpu.memory_space<semaphore_mem>>)
      %c6 = arith.constant 6 : index
      %123 = memref.load %arg1[%c6] : memref<8xi32, #tpu.memory_space<smem>>
      %c0_i32_74 = arith.constant 0 : i32
      %c6_i32 = arith.constant 6 : i32
      %c0_i32_75 = arith.constant 0 : i32
      %124 = tpu.memref_slice %arg2[%c0_i32_74, %123, %c0_i32_75] : memref<4x8x128xf32, #tpu.memory_space<any>> -> memref<1x1x128xf32, #tpu.memory_space<any>>
      %125 = tpu.memref_squeeze %124 : memref<1x1x128xf32, #tpu.memory_space<any>> -> memref<1x128xf32, #tpu.memory_space<any>>
      %c6_i32_76 = arith.constant 6 : i32
      %c0_i32_77 = arith.constant 0 : i32
      %126 = tpu.memref_slice %arg9[%c6_i32_76, %c0_i32_77] : memref<8x128xf32, #tpu.memory_space<vmem>> -> memref<1x128xf32, #tpu.memory_space<vmem>>
      %127 = tpu.memref_slice %arg16[%c6_i32] : memref<8x!tpu.dma_semaphore, #tpu.memory_space<semaphore_mem>> -> memref<1x!tpu.dma_semaphore, #tpu.memory_space<semaphore_mem>>
      %128 = tpu.memref_squeeze %127 : memref<1x!tpu.dma_semaphore, #tpu.memory_space<semaphore_mem>> -> memref<!tpu.dma_semaphore, #tpu.memory_space<semaphore_mem>>
      tpu.enqueue_dma source(%125 : memref<1x128xf32, #tpu.memory_space<any>>) target(%126 : memref<1x128xf32, #tpu.memory_space<vmem>>) target_semaphore(%128 : memref<!tpu.dma_semaphore, #tpu.memory_space<semaphore_mem>>)
      %c7 = arith.constant 7 : index
      %129 = memref.load %arg1[%c7] : memref<8xi32, #tpu.memory_space<smem>>
      %c0_i32_78 = arith.constant 0 : i32
      %c7_i32 = arith.constant 7 : i32
      %c0_i32_79 = arith.constant 0 : i32
      %130 = tpu.memref_slice %arg2[%c0_i32_78, %129, %c0_i32_79] : memref<4x8x128xf32, #tpu.memory_space<any>> -> memref<1x1x128xf32, #tpu.memory_space<any>>
      %131 = tpu.memref_squeeze %130 : memref<1x1x128xf32, #tpu.memory_space<any>> -> memref<1x128xf32, #tpu.memory_space<any>>
      %c7_i32_80 = arith.constant 7 : i32
      %c0_i32_81 = arith.constant 0 : i32
      %132 = tpu.memref_slice %arg9[%c7_i32_80, %c0_i32_81] : memref<8x128xf32, #tpu.memory_space<vmem>> -> memref<1x128xf32, #tpu.memory_space<vmem>>
      %133 = tpu.memref_slice %arg16[%c7_i32] : memref<8x!tpu.dma_semaphore, #tpu.memory_space<semaphore_mem>> -> memref<1x!tpu.dma_semaphore, #tpu.memory_space<semaphore_mem>>
      %134 = tpu.memref_squeeze %133 : memref<1x!tpu.dma_semaphore, #tpu.memory_space<semaphore_mem>> -> memref<!tpu.dma_semaphore, #tpu.memory_space<semaphore_mem>>
      tpu.enqueue_dma source(%131 : memref<1x128xf32, #tpu.memory_space<any>>) target(%132 : memref<1x128xf32, #tpu.memory_space<vmem>>) target_semaphore(%134 : memref<!tpu.dma_semaphore, #tpu.memory_space<semaphore_mem>>)
      %c0_i32_82 = arith.constant 0 : i32
      %c0_i32_83 = arith.constant 0 : i32
      %c0_i32_84 = arith.constant 0 : i32
      %135 = tpu.memref_slice %arg2[%c0_i32_82, %87, %c0_i32_84] : memref<4x8x128xf32, #tpu.memory_space<any>> -> memref<1x1x128xf32, #tpu.memory_space<any>>
      %136 = tpu.memref_squeeze %135 : memref<1x1x128xf32, #tpu.memory_space<any>> -> memref<1x128xf32, #tpu.memory_space<any>>
      %c0_i32_85 = arith.constant 0 : i32
      %c0_i32_86 = arith.constant 0 : i32
      %137 = tpu.memref_slice %arg9[%c0_i32_85, %c0_i32_86] : memref<8x128xf32, #tpu.memory_space<vmem>> -> memref<1x128xf32, #tpu.memory_space<vmem>>
      %138 = tpu.memref_slice %arg16[%c0_i32_83] : memref<8x!tpu.dma_semaphore, #tpu.memory_space<semaphore_mem>> -> memref<1x!tpu.dma_semaphore, #tpu.memory_space<semaphore_mem>>
      %139 = tpu.memref_squeeze %138 : memref<1x!tpu.dma_semaphore, #tpu.memory_space<semaphore_mem>> -> memref<!tpu.dma_semaphore, #tpu.memory_space<semaphore_mem>>
      tpu.wait_dma2 semaphore(%139 : memref<!tpu.dma_semaphore, #tpu.memory_space<semaphore_mem>>) src(%136 : memref<1x128xf32, #tpu.memory_space<any>>) dst(%137 : memref<1x128xf32, #tpu.memory_space<vmem>>)
      %c1_i32_87 = arith.constant 1 : i32
      %c1_i32_88 = arith.constant 1 : i32
      %c0_i32_89 = arith.constant 0 : i32
      %140 = tpu.memref_slice %arg2[%c1_i32_87, %93, %c0_i32_89] : memref<4x8x128xf32, #tpu.memory_space<any>> -> memref<1x1x128xf32, #tpu.memory_space<any>>
      %141 = tpu.memref_squeeze %140 : memref<1x1x128xf32, #tpu.memory_space<any>> -> memref<1x128xf32, #tpu.memory_space<any>>
      %c1_i32_90 = arith.constant 1 : i32
      %c0_i32_91 = arith.constant 0 : i32
      %142 = tpu.memref_slice %arg9[%c1_i32_90, %c0_i32_91] : memref<8x128xf32, #tpu.memory_space<vmem>> -> memref<1x128xf32, #tpu.memory_space<vmem>>
      %143 = tpu.memref_slice %arg16[%c1_i32_88] : memref<8x!tpu.dma_semaphore, #tpu.memory_space<semaphore_mem>> -> memref<1x!tpu.dma_semaphore, #tpu.memory_space<semaphore_mem>>
      %144 = tpu.memref_squeeze %143 : memref<1x!tpu.dma_semaphore, #tpu.memory_space<semaphore_mem>> -> memref<!tpu.dma_semaphore, #tpu.memory_space<semaphore_mem>>
      tpu.wait_dma2 semaphore(%144 : memref<!tpu.dma_semaphore, #tpu.memory_space<semaphore_mem>>) src(%141 : memref<1x128xf32, #tpu.memory_space<any>>) dst(%142 : memref<1x128xf32, #tpu.memory_space<vmem>>)
      %c2_i32_92 = arith.constant 2 : i32
      %c2_i32_93 = arith.constant 2 : i32
      %c0_i32_94 = arith.constant 0 : i32
      %145 = tpu.memref_slice %arg2[%c2_i32_92, %99, %c0_i32_94] : memref<4x8x128xf32, #tpu.memory_space<any>> -> memref<1x1x128xf32, #tpu.memory_space<any>>
      %146 = tpu.memref_squeeze %145 : memref<1x1x128xf32, #tpu.memory_space<any>> -> memref<1x128xf32, #tpu.memory_space<any>>
      %c2_i32_95 = arith.constant 2 : i32
      %c0_i32_96 = arith.constant 0 : i32
      %147 = tpu.memref_slice %arg9[%c2_i32_95, %c0_i32_96] : memref<8x128xf32, #tpu.memory_space<vmem>> -> memref<1x128xf32, #tpu.memory_space<vmem>>
      %148 = tpu.memref_slice %arg16[%c2_i32_93] : memref<8x!tpu.dma_semaphore, #tpu.memory_space<semaphore_mem>> -> memref<1x!tpu.dma_semaphore, #tpu.memory_space<semaphore_mem>>
      %149 = tpu.memref_squeeze %148 : memref<1x!tpu.dma_semaphore, #tpu.memory_space<semaphore_mem>> -> memref<!tpu.dma_semaphore, #tpu.memory_space<semaphore_mem>>
      tpu.wait_dma2 semaphore(%149 : memref<!tpu.dma_semaphore, #tpu.memory_space<semaphore_mem>>) src(%146 : memref<1x128xf32, #tpu.memory_space<any>>) dst(%147 : memref<1x128xf32, #tpu.memory_space<vmem>>)
      %c3_i32_97 = arith.constant 3 : i32
      %c3_i32_98 = arith.constant 3 : i32
      %c0_i32_99 = arith.constant 0 : i32
      %150 = tpu.memref_slice %arg2[%c3_i32_97, %105, %c0_i32_99] : memref<4x8x128xf32, #tpu.memory_space<any>> -> memref<1x1x128xf32, #tpu.memory_space<any>>
      %151 = tpu.memref_squeeze %150 : memref<1x1x128xf32, #tpu.memory_space<any>> -> memref<1x128xf32, #tpu.memory_space<any>>
      %c3_i32_100 = arith.constant 3 : i32
      %c0_i32_101 = arith.constant 0 : i32
      %152 = tpu.memref_slice %arg9[%c3_i32_100, %c0_i32_101] : memref<8x128xf32, #tpu.memory_space<vmem>> -> memref<1x128xf32, #tpu.memory_space<vmem>>
      %153 = tpu.memref_slice %arg16[%c3_i32_98] : memref<8x!tpu.dma_semaphore, #tpu.memory_space<semaphore_mem>> -> memref<1x!tpu.dma_semaphore, #tpu.memory_space<semaphore_mem>>
      %154 = tpu.memref_squeeze %153 : memref<1x!tpu.dma_semaphore, #tpu.memory_space<semaphore_mem>> -> memref<!tpu.dma_semaphore, #tpu.memory_space<semaphore_mem>>
      tpu.wait_dma2 semaphore(%154 : memref<!tpu.dma_semaphore, #tpu.memory_space<semaphore_mem>>) src(%151 : memref<1x128xf32, #tpu.memory_space<any>>) dst(%152 : memref<1x128xf32, #tpu.memory_space<vmem>>)
      %c0_i32_102 = arith.constant 0 : i32
      %c4_i32_103 = arith.constant 4 : i32
      %c0_i32_104 = arith.constant 0 : i32
      %155 = tpu.memref_slice %arg2[%c0_i32_102, %111, %c0_i32_104] : memref<4x8x128xf32, #tpu.memory_space<any>> -> memref<1x1x128xf32, #tpu.memory_space<any>>
      %156 = tpu.memref_squeeze %155 : memref<1x1x128xf32, #tpu.memory_space<any>> -> memref<1x128xf32, #tpu.memory_space<any>>
      %c4_i32_105 = arith.constant 4 : i32
      %c0_i32_106 = arith.constant 0 : i32
      %157 = tpu.memref_slice %arg9[%c4_i32_105, %c0_i32_106] : memref<8x128xf32, #tpu.memory_space<vmem>> -> memref<1x128xf32, #tpu.memory_space<vmem>>
      %158 = tpu.memref_slice %arg16[%c4_i32_103] : memref<8x!tpu.dma_semaphore, #tpu.memory_space<semaphore_mem>> -> memref<1x!tpu.dma_semaphore, #tpu.memory_space<semaphore_mem>>
      %159 = tpu.memref_squeeze %158 : memref<1x!tpu.dma_semaphore, #tpu.memory_space<semaphore_mem>> -> memref<!tpu.dma_semaphore, #tpu.memory_space<semaphore_mem>>
      tpu.wait_dma2 semaphore(%159 : memref<!tpu.dma_semaphore, #tpu.memory_space<semaphore_mem>>) src(%156 : memref<1x128xf32, #tpu.memory_space<any>>) dst(%157 : memref<1x128xf32, #tpu.memory_space<vmem>>)
      %c0_i32_107 = arith.constant 0 : i32
      %c5_i32_108 = arith.constant 5 : i32
      %c0_i32_109 = arith.constant 0 : i32
      %160 = tpu.memref_slice %arg2[%c0_i32_107, %117, %c0_i32_109] : memref<4x8x128xf32, #tpu.memory_space<any>> -> memref<1x1x128xf32, #tpu.memory_space<any>>
      %161 = tpu.memref_squeeze %160 : memref<1x1x128xf32, #tpu.memory_space<any>> -> memref<1x128xf32, #tpu.memory_space<any>>
      %c5_i32_110 = arith.constant 5 : i32
      %c0_i32_111 = arith.constant 0 : i32
      %162 = tpu.memref_slice %arg9[%c5_i32_110, %c0_i32_111] : memref<8x128xf32, #tpu.memory_space<vmem>> -> memref<1x128xf32, #tpu.memory_space<vmem>>
      %163 = tpu.memref_slice %arg16[%c5_i32_108] : memref<8x!tpu.dma_semaphore, #tpu.memory_space<semaphore_mem>> -> memref<1x!tpu.dma_semaphore, #tpu.memory_space<semaphore_mem>>
      %164 = tpu.memref_squeeze %163 : memref<1x!tpu.dma_semaphore, #tpu.memory_space<semaphore_mem>> -> memref<!tpu.dma_semaphore, #tpu.memory_space<semaphore_mem>>
      tpu.wait_dma2 semaphore(%164 : memref<!tpu.dma_semaphore, #tpu.memory_space<semaphore_mem>>) src(%161 : memref<1x128xf32, #tpu.memory_space<any>>) dst(%162 : memref<1x128xf32, #tpu.memory_space<vmem>>)
      %c0_i32_112 = arith.constant 0 : i32
      %c6_i32_113 = arith.constant 6 : i32
      %c0_i32_114 = arith.constant 0 : i32
      %165 = tpu.memref_slice %arg2[%c0_i32_112, %123, %c0_i32_114] : memref<4x8x128xf32, #tpu.memory_space<any>> -> memref<1x1x128xf32, #tpu.memory_space<any>>
      %166 = tpu.memref_squeeze %165 : memref<1x1x128xf32, #tpu.memory_space<any>> -> memref<1x128xf32, #tpu.memory_space<any>>
      %c6_i32_115 = arith.constant 6 : i32
      %c0_i32_116 = arith.constant 0 : i32
      %167 = tpu.memref_slice %arg9[%c6_i32_115, %c0_i32_116] : memref<8x128xf32, #tpu.memory_space<vmem>> -> memref<1x128xf32, #tpu.memory_space<vmem>>
      %168 = tpu.memref_slice %arg16[%c6_i32_113] : memref<8x!tpu.dma_semaphore, #tpu.memory_space<semaphore_mem>> -> memref<1x!tpu.dma_semaphore, #tpu.memory_space<semaphore_mem>>
      %169 = tpu.memref_squeeze %168 : memref<1x!tpu.dma_semaphore, #tpu.memory_space<semaphore_mem>> -> memref<!tpu.dma_semaphore, #tpu.memory_space<semaphore_mem>>
      tpu.wait_dma2 semaphore(%169 : memref<!tpu.dma_semaphore, #tpu.memory_space<semaphore_mem>>) src(%166 : memref<1x128xf32, #tpu.memory_space<any>>) dst(%167 : memref<1x128xf32, #tpu.memory_space<vmem>>)
      %c0_i32_117 = arith.constant 0 : i32
      %c7_i32_118 = arith.constant 7 : i32
      %c0_i32_119 = arith.constant 0 : i32
      %170 = tpu.memref_slice %arg2[%c0_i32_117, %129, %c0_i32_119] : memref<4x8x128xf32, #tpu.memory_space<any>> -> memref<1x1x128xf32, #tpu.memory_space<any>>
      %171 = tpu.memref_squeeze %170 : memref<1x1x128xf32, #tpu.memory_space<any>> -> memref<1x128xf32, #tpu.memory_space<any>>
      %c7_i32_120 = arith.constant 7 : i32
      %c0_i32_121 = arith.constant 0 : i32
      %172 = tpu.memref_slice %arg9[%c7_i32_120, %c0_i32_121] : memref<8x128xf32, #tpu.memory_space<vmem>> -> memref<1x128xf32, #tpu.memory_space<vmem>>
      %173 = tpu.memref_slice %arg16[%c7_i32_118] : memref<8x!tpu.dma_semaphore, #tpu.memory_space<semaphore_mem>> -> memref<1x!tpu.dma_semaphore, #tpu.memory_space<semaphore_mem>>
      %174 = tpu.memref_squeeze %173 : memref<1x!tpu.dma_semaphore, #tpu.memory_space<semaphore_mem>> -> memref<!tpu.dma_semaphore, #tpu.memory_space<semaphore_mem>>
      tpu.wait_dma2 semaphore(%174 : memref<!tpu.dma_semaphore, #tpu.memory_space<semaphore_mem>>) src(%171 : memref<1x128xf32, #tpu.memory_space<any>>) dst(%172 : memref<1x128xf32, #tpu.memory_space<vmem>>)
      %c0_122 = arith.constant 0 : index
      %c0_123 = arith.constant 0 : index
      %175 = vector.load %arg9[%c0_122, %c0_123] : memref<8x128xf32, #tpu.memory_space<vmem>>, vector<8x128xf32>
      %c0_124 = arith.constant 0 : index
      %c0_125 = arith.constant 0 : index
      %176 = vector.load %arg5[%c0_124, %c0_125] : memref<8x128xf32, #tpu.memory_space<vmem>>, vector<8x128xf32>
      tpu.vector_store %arg5[%c0_124, %c0_125], %175 {strides = array<i32>} : memref<8x128xf32, #tpu.memory_space<vmem>>, vector<8x128xf32>,
      %177 = arith.mulf %175, %175 : vector<8x128xf32>
      %cst_126 = arith.constant dense<0.000000e+00> : vector<8xf32>
      %178 = vector.multi_reduction <add>, %177, %cst_126 [1] : vector<8x128xf32> to vector<8xf32>
      %179 = vector.shape_cast %178 : vector<8xf32> to vector<8x1xf32>
      %cst_127 = arith.constant 1.000000e-24 : f32
      %180 = vector.broadcast %cst_127 : f32 to vector<8x1xf32>
      %181 = arith.maximumf %179, %180 : vector<8x1xf32>
      %182 = math.rsqrt %181 : vector<8x1xf32>
      %183 = vector.broadcast %182 : vector<8x1xf32> to vector<8x128xf32>
      %184 = arith.mulf %175, %183 : vector<8x128xf32>
      %185 = arith.truncf %184 : vector<8x128xf32> to vector<8x128xbf16>
      %c0_128 = arith.constant 0 : index
      %c0_129 = arith.constant 0 : index
      %186 = vector.load %arg10[%c0_128, %c0_129] : memref<8x128xbf16, #tpu.memory_space<vmem>>, vector<8x128xbf16>
      tpu.vector_store %arg10[%c0_128, %c0_129], %185 {strides = array<i32>} : memref<8x128xbf16, #tpu.memory_space<vmem>>, vector<8x128xbf16>,
      %cst_130 = arith.constant -1.000000e+30 : f32
      %187 = vector.broadcast %cst_130 : f32 to vector<8x1xf32>
      %c0_131 = arith.constant 0 : index
      %c0_132 = arith.constant 0 : index
      %188 = vector.load %arg11[%c0_131, %c0_132] : memref<8x1xf32, #tpu.memory_space<vmem>>, vector<8x1xf32>
      tpu.vector_store %arg11[%c0_131, %c0_132], %187 {strides = array<i32>} : memref<8x1xf32, #tpu.memory_space<vmem>>, vector<8x1xf32>,
      %cst_133 = arith.constant 0.000000e+00 : f32
      %189 = vector.broadcast %cst_133 : f32 to vector<8x1xf32>
      %c0_134 = arith.constant 0 : index
      %c0_135 = arith.constant 0 : index
      %190 = vector.load %arg12[%c0_134, %c0_135] : memref<8x1xf32, #tpu.memory_space<vmem>>, vector<8x1xf32>
      tpu.vector_store %arg12[%c0_134, %c0_135], %189 {strides = array<i32>} : memref<8x1xf32, #tpu.memory_space<vmem>>, vector<8x1xf32>,
      %cst_136 = arith.constant 0.000000e+00 : f32
      %191 = vector.broadcast %cst_136 : f32 to vector<8x1xf32>
      %c0_137 = arith.constant 0 : index
      %c0_138 = arith.constant 0 : index
      %192 = vector.load %arg13[%c0_137, %c0_138] : memref<8x1xf32, #tpu.memory_space<vmem>>, vector<8x1xf32>
      tpu.vector_store %arg13[%c0_137, %c0_138], %191 {strides = array<i32>} : memref<8x1xf32, #tpu.memory_space<vmem>>, vector<8x1xf32>,
      %cst_139 = arith.constant 0.000000e+00 : f32
      %193 = vector.broadcast %cst_139 : f32 to vector<8x1xf32>
      %c0_140 = arith.constant 0 : index
      %c0_141 = arith.constant 0 : index
      %194 = vector.load %arg14[%c0_140, %c0_141] : memref<8x1xf32, #tpu.memory_space<vmem>>, vector<8x1xf32>
      tpu.vector_store %arg14[%c0_140, %c0_141], %193 {strides = array<i32>} : memref<8x1xf32, #tpu.memory_space<vmem>>, vector<8x1xf32>,
      %cst_142 = arith.constant 0.000000e+00 : f32
      %195 = vector.broadcast %cst_142 : f32 to vector<8x1xf32>
      %c0_143 = arith.constant 0 : index
      %c0_144 = arith.constant 0 : index
      %196 = vector.load %arg15[%c0_143, %c0_144] : memref<8x1xf32, #tpu.memory_space<vmem>>, vector<8x1xf32>
      tpu.vector_store %arg15[%c0_143, %c0_144], %195 {strides = array<i32>} : memref<8x1xf32, #tpu.memory_space<vmem>>, vector<8x1xf32>,
    } else {
    }
    %c0 = arith.constant 0 : index
    %c0_1 = arith.constant 0 : index
    %3 = vector.load %arg3[%c0, %c0_1] : memref<8x128xf32, #tpu.memory_space<vmem>>, vector<8x128xf32>
    %c0_2 = arith.constant 0 : index
    %c0_3 = arith.constant 0 : index
    %4 = vector.load %arg4[%c0_2, %c0_3] : memref<128x128xf32, #tpu.memory_space<vmem>>, vector<128x128xf32>
    %5 = arith.mulf %4, %4 : vector<128x128xf32>
    %cst = arith.constant dense<0.000000e+00> : vector<128xf32>
    %6 = vector.multi_reduction <add>, %5, %cst [0] : vector<128x128xf32> to vector<128xf32>
    %7 = vector.shape_cast %6 : vector<128xf32> to vector<1x128xf32>
    %cst_4 = arith.constant 1.000000e-24 : f32
    %8 = vector.broadcast %cst_4 : f32 to vector<1x128xf32>
    %9 = arith.maximumf %7, %8 : vector<1x128xf32>
    %10 = math.rsqrt %9 : vector<1x128xf32>
    %11 = vector.broadcast %10 : vector<1x128xf32> to vector<128x128xf32>
    %12 = arith.mulf %4, %11 : vector<128x128xf32>
    %13 = arith.truncf %12 : vector<128x128xf32> to vector<128x128xbf16>
    %c0_5 = arith.constant 0 : index
    %c0_6 = arith.constant 0 : index
    %14 = vector.load %arg10[%c0_5, %c0_6] : memref<8x128xbf16, #tpu.memory_space<vmem>>, vector<8x128xbf16>
    %cst_7 = arith.constant dense<0.000000e+00> : vector<8x128xf32>
    %15 = tpu.matmul %14, %13, %cst_7 {dimension_numbers = #tpu.dot_dimension_numbers<[1], [0], [0], [1], [0, 0, 1, 1], [], []>} : vector<8x128xbf16>, vector<128x128xbf16>, vector<8x128xf32> -> vector<8x128xf32>
    %16 = arith.mulf %15, %15 : vector<8x128xf32>
    %cst_8 = arith.constant 1.000000e+00 : f32
    %17 = vector.broadcast %cst_8 : f32 to vector<8x128xf32>
    %18 = arith.subf %17, %16 : vector<8x128xf32>
    %cst_9 = arith.constant 0.000000e+00 : f32
    %cst_10 = arith.constant 1.000000e+00 : f32
    %19 = vector.broadcast %cst_9 : f32 to vector<8x128xf32>
    %20 = arith.maximumf %19, %18 : vector<8x128xf32>
    %21 = vector.broadcast %cst_10 : f32 to vector<8x128xf32>
    %22 = arith.minimumf %21, %20 : vector<8x128xf32>
    %23 = math.sqrt %22 : vector<8x128xf32>
    %cst_11 = arith.constant 0.87758255 : f32
    %24 = vector.broadcast %cst_11 : f32 to vector<8x128xf32>
    %25 = arith.mulf %15, %24 : vector<8x128xf32>
    %cst_12 = arith.constant 0.47942555 : f32
    %26 = vector.broadcast %cst_12 : f32 to vector<8x128xf32>
    %27 = arith.mulf %23, %26 : vector<8x128xf32>
    %28 = arith.subf %25, %27 : vector<8x128xf32>
    %cst_13 = arith.constant -0.87758255 : f32
    %29 = vector.broadcast %cst_13 : f32 to vector<8x128xf32>
    %30 = arith.cmpf ogt, %15, %29 : vector<8x128xf32>
    %cst_14 = arith.constant 0.239712775 : f32
    %31 = vector.broadcast %cst_14 : f32 to vector<8x128xf32>
    %32 = arith.subf %15, %31 : vector<8x128xf32>
    %33 = arith.select %30, %28, %32 : vector<8x128xi1>, vector<8x128xf32>
    %34 = arith.mulf %3, %33 : vector<8x128xf32>
    %cst_15 = arith.constant 1.000000e+00 : f32
    %35 = vector.broadcast %cst_15 : f32 to vector<8x128xf32>
    %36 = arith.subf %35, %3 : vector<8x128xf32>
    %37 = arith.mulf %36, %15 : vector<8x128xf32>
    %38 = arith.addf %34, %37 : vector<8x128xf32>
    %cst_16 = arith.constant 3.000000e+01 : f32
    %39 = vector.broadcast %cst_16 : f32 to vector<8x128xf32>
    %40 = arith.mulf %39, %38 : vector<8x128xf32>
    %c0_17 = arith.constant 0 : index
    %c0_18 = arith.constant 0 : index
    %41 = vector.load %arg6[%c0_17, %c0_18] : memref<8x128xf32, #tpu.memory_space<vmem>>, vector<8x128xf32>
    tpu.vector_store %arg6[%c0_17, %c0_18], %40 {strides = array<i32>} : memref<8x128xf32, #tpu.memory_space<vmem>>, vector<8x128xf32>,
    %c0_19 = arith.constant 0 : index
    %c0_20 = arith.constant 0 : index
    %42 = vector.load %arg11[%c0_19, %c0_20] : memref<8x1xf32, #tpu.memory_space<vmem>>, vector<8x1xf32>
    %cst_21 = arith.constant dense<0xFF800000> : vector<8xf32>
    %43 = vector.multi_reduction <maximumf>, %40, %cst_21 [1] : vector<8x128xf32> to vector<8xf32>
    %44 = vector.shape_cast %43 : vector<8xf32> to vector<8x1xf32>
    %45 = arith.maximumf %42, %44 : vector<8x1xf32>
    %c0_22 = arith.constant 0 : index
    %c0_23 = arith.constant 0 : index
    %46 = vector.load %arg12[%c0_22, %c0_23] : memref<8x1xf32, #tpu.memory_space<vmem>>, vector<8x1xf32>
    %47 = arith.subf %42, %45 : vector<8x1xf32>
    %48 = math.exp %47 : vector<8x1xf32>
    %49 = arith.mulf %46, %48 : vector<8x1xf32>
    %50 = vector.broadcast %45 : vector<8x1xf32> to vector<8x128xf32>
    %51 = arith.subf %40, %50 : vector<8x128xf32>
    %52 = math.exp %51 : vector<8x128xf32>
    %cst_24 = arith.constant dense<0.000000e+00> : vector<8xf32>
    %53 = vector.multi_reduction <add>, %52, %cst_24 [1] : vector<8x128xf32> to vector<8xf32>
    %54 = vector.shape_cast %53 : vector<8xf32> to vector<8x1xf32>
    %55 = arith.addf %49, %54 : vector<8x1xf32>
    %c0_25 = arith.constant 0 : index
    %c0_26 = arith.constant 0 : index
    %56 = vector.load %arg12[%c0_25, %c0_26] : memref<8x1xf32, #tpu.memory_space<vmem>>, vector<8x1xf32>
    tpu.vector_store %arg12[%c0_25, %c0_26], %55 {strides = array<i32>} : memref<8x1xf32, #tpu.memory_space<vmem>>, vector<8x1xf32>,
    %c0_27 = arith.constant 0 : index
    %c0_28 = arith.constant 0 : index
    %57 = vector.load %arg11[%c0_27, %c0_28] : memref<8x1xf32, #tpu.memory_space<vmem>>, vector<8x1xf32>
    tpu.vector_store %arg11[%c0_27, %c0_28], %45 {strides = array<i32>} : memref<8x1xf32, #tpu.memory_space<vmem>>, vector<8x1xf32>,
    %c0_29 = arith.constant 0 : index
    %c0_30 = arith.constant 0 : index
    %58 = vector.load %arg13[%c0_29, %c0_30] : memref<8x1xf32, #tpu.memory_space<vmem>>, vector<8x1xf32>
    %59 = arith.mulf %3, %40 : vector<8x128xf32>
    %cst_31 = arith.constant dense<0.000000e+00> : vector<8xf32>
    %60 = vector.multi_reduction <add>, %59, %cst_31 [1] : vector<8x128xf32> to vector<8xf32>
    %61 = vector.shape_cast %60 : vector<8xf32> to vector<8x1xf32>
    %62 = arith.addf %58, %61 : vector<8x1xf32>
    %c0_32 = arith.constant 0 : index
    %c0_33 = arith.constant 0 : index
    %63 = vector.load %arg13[%c0_32, %c0_33] : memref<8x1xf32, #tpu.memory_space<vmem>>, vector<8x1xf32>
    tpu.vector_store %arg13[%c0_32, %c0_33], %62 {strides = array<i32>} : memref<8x1xf32, #tpu.memory_space<vmem>>, vector<8x1xf32>,
    %c0_34 = arith.constant 0 : index
    %c0_35 = arith.constant 0 : index
    %64 = vector.load %arg14[%c0_34, %c0_35] : memref<8x1xf32, #tpu.memory_space<vmem>>, vector<8x1xf32>
    %cst_36 = arith.constant dense<0.000000e+00> : vector<8xf32>
    %65 = vector.multi_reduction <add>, %3, %cst_36 [1] : vector<8x128xf32> to vector<8xf32>
    %66 = vector.shape_cast %65 : vector<8xf32> to vector<8x1xf32>
    %67 = arith.addf %64, %66 : vector<8x1xf32>
    %c0_37 = arith.constant 0 : index
    %c0_38 = arith.constant 0 : index
    %68 = vector.load %arg14[%c0_37, %c0_38] : memref<8x1xf32, #tpu.memory_space<vmem>>, vector<8x1xf32>
    tpu.vector_store %arg14[%c0_37, %c0_38], %67 {strides = array<i32>} : memref<8x1xf32, #tpu.memory_space<vmem>>, vector<8x1xf32>,
    %69 = math.absf %40 : vector<8x128xf32>
    %cst_39 = arith.constant 0.000000e+00 : f32
    %70 = vector.broadcast %cst_39 : f32 to vector<8x128xf32>
    %71 = arith.subf %70, %69 : vector<8x128xf32>
    %72 = math.exp %71 : vector<8x128xf32>
    %c0_40 = arith.constant 0 : index
    %c0_41 = arith.constant 0 : index
    %73 = vector.load %arg15[%c0_40, %c0_41] : memref<8x1xf32, #tpu.memory_space<vmem>>, vector<8x1xf32>
    %cst_42 = arith.constant 0.000000e+00 : f32
    %74 = vector.broadcast %cst_42 : f32 to vector<8x128xf32>
    %75 = arith.maximumf %40, %74 : vector<8x128xf32>
    %76 = arith.mulf %40, %3 : vector<8x128xf32>
    %77 = arith.subf %75, %76 : vector<8x128xf32>
    %78 = math.log1p %72 : vector<8x128xf32>
    %79 = arith.addf %77, %78 : vector<8x128xf32>
    %cst_43 = arith.constant dense<0.000000e+00> : vector<8xf32>
    %80 = vector.multi_reduction <add>, %79, %cst_43 [1] : vector<8x128xf32> to vector<8xf32>
    %81 = vector.shape_cast %80 : vector<8xf32> to vector<8x1xf32>
    %82 = arith.addf %73, %81 : vector<8x1xf32>
    %c0_44 = arith.constant 0 : index
    %c0_45 = arith.constant 0 : index
    %83 = vector.load %arg15[%c0_44, %c0_45] : memref<8x1xf32, #tpu.memory_space<vmem>>, vector<8x1xf32>
    tpu.vector_store %arg15[%c0_44, %c0_45], %82 {strides = array<i32>} : memref<8x1xf32, #tpu.memory_space<vmem>>, vector<8x1xf32>,
    %c0_i32_46 = arith.constant 0 : i32
    %84 = arith.cmpi eq, %arg0, %c0_i32_46 : i32
    %85 = arith.extui %84 : i1 to i32
    %c0_i32_47 = arith.constant 0 : i32
    %86 = arith.cmpi ne, %85, %c0_i32_47 : i32
    scf.if %86 {
      %87 = tpu.iota {dimensions = array<i32: 0>} : vector<8x1xi32>
      %c4_i32 = arith.constant 4 : i32
      %88 = vector.broadcast %c4_i32 : i32 to vector<8x1xi32>
      %89 = arith.cmpi slt, %87, %88 : vector<8x1xi32>
      %c0_48 = arith.constant 0 : index
      %c0_49 = arith.constant 0 : index
      %90 = vector.load %arg11[%c0_48, %c0_49] : memref<8x1xf32, #tpu.memory_space<vmem>>, vector<8x1xf32>
      %c0_50 = arith.constant 0 : index
      %c0_51 = arith.constant 0 : index
      %91 = vector.load %arg12[%c0_50, %c0_51] : memref<8x1xf32, #tpu.memory_space<vmem>>, vector<8x1xf32>
      %92 = math.log %91 : vector<8x1xf32>
      %93 = arith.addf %90, %92 : vector<8x1xf32>
      %c0_52 = arith.constant 0 : index
      %c0_53 = arith.constant 0 : index
      %94 = vector.load %arg13[%c0_52, %c0_53] : memref<8x1xf32, #tpu.memory_space<vmem>>, vector<8x1xf32>
      %cst_54 = arith.constant 0.000000e+00 : f32
      %95 = vector.broadcast %cst_54 : f32 to vector<8x1xf32>
      %96 = arith.subf %95, %94 : vector<8x1xf32>
      %c0_55 = arith.constant 0 : index
      %c0_56 = arith.constant 0 : index
      %97 = vector.load %arg14[%c0_55, %c0_56] : memref<8x1xf32, #tpu.memory_space<vmem>>, vector<8x1xf32>
      %98 = arith.mulf %97, %93 : vector<8x1xf32>
      %99 = arith.addf %96, %98 : vector<8x1xf32>
      %cst_57 = arith.constant 0.000000e+00 : f32
      %100 = vector.broadcast %cst_57 : f32 to vector<8x1xf32>
      %101 = arith.select %89, %99, %100 : vector<8x1xi1>, vector<8x1xf32>
      %102 = vector.shape_cast %101 : vector<8x1xf32> to vector<1x8x1xf32>
      %cst_58 = arith.constant dense<0.000000e+00> : vector<1xf32>
      %103 = vector.multi_reduction <add>, %102, %cst_58 [1, 2] : vector<1x8x1xf32> to vector<1xf32>
      %104 = vector.shape_cast %103 : vector<1xf32> to vector<1x1x1xf32>
      %105 = vector.extract %104[0, 0, 0] : f32 from vector<1x1x1xf32>
      %c0_59 = arith.constant 0 : index
      %c0_60 = arith.constant 0 : index
      %106 = vector.load %arg15[%c0_59, %c0_60] : memref<8x1xf32, #tpu.memory_space<vmem>>, vector<8x1xf32>
      %cst_61 = arith.constant 0.000000e+00 : f32
      %107 = vector.broadcast %cst_61 : f32 to vector<8x1xf32>
      %108 = arith.select %89, %106, %107 : vector<8x1xi1>, vector<8x1xf32>
      %109 = vector.shape_cast %108 : vector<8x1xf32> to vector<1x8x1xf32>
      %cst_62 = arith.constant dense<0.000000e+00> : vector<1xf32>
      %110 = vector.multi_reduction <add>, %109, %cst_62 [1, 2] : vector<1x8x1xf32> to vector<1xf32>
      %111 = vector.shape_cast %110 : vector<1xf32> to vector<1x1x1xf32>
      %112 = vector.extract %111[0, 0, 0] : f32 from vector<1x1x1xf32>
      %cst_63 = arith.constant 2.500000e-01 : f32
      %113 = arith.mulf %105, %cst_63 : f32
      %c0_64 = arith.constant 0 : index
      %c0_65 = arith.constant 0 : index
      %114 = memref.load %arg7[%c0_64, %c0_65] : memref<1x1xf32, #tpu.memory_space<smem>>
      memref.store %113, %arg7[%c0_64, %c0_65] : memref<1x1xf32, #tpu.memory_space<smem>>
      %cst_66 = arith.constant 0.001953125 : f32
      %115 = arith.mulf %112, %cst_66 : f32
      %c0_67 = arith.constant 0 : index
      %c0_68 = arith.constant 0 : index
      %116 = memref.load %arg8[%c0_67, %c0_68] : memref<1x1xf32, #tpu.memory_space<smem>>
      memref.store %115, %arg8[%c0_67, %c0_68] : memref<1x1xf32, #tpu.memory_space<smem>>
    } else {
    }
    return
  }
  func.func @transform_1(%arg0: i32, %arg1: memref<8xi32, #tpu.memory_space<smem>>) -> (i32, i32) {
    %c0_i32 = arith.constant 0 : i32
    %c0_i32_0 = arith.constant 0 : i32
    return %c0_i32, %arg0 : i32, i32
  }
  func.func @transform_2(%arg0: i32, %arg1: memref<8xi32, #tpu.memory_space<smem>>) -> (i32, i32) {
    %c0_i32 = arith.constant 0 : i32
    %c0_i32_0 = arith.constant 0 : i32
    return %c0_i32, %arg0 : i32, i32
  }
  func.func @transform_3(%arg0: i32, %arg1: memref<8xi32, #tpu.memory_space<smem>>) -> (i32, i32) {
    %c0_i32 = arith.constant 0 : i32
    %c0_i32_0 = arith.constant 0 : i32
    %c0_i32_1 = arith.constant 0 : i32
    return %c0_i32, %c0_i32_0 : i32, i32
  }
  func.func @transform_4(%arg0: i32, %arg1: memref<8xi32, #tpu.memory_space<smem>>) -> (i32, i32) {
    %c0_i32 = arith.constant 0 : i32
    %c0_i32_0 = arith.constant 0 : i32
    return %c0_i32, %arg0 : i32, i32
  }
  func.func @transform_5(%arg0: i32, %arg1: memref<8xi32, #tpu.memory_space<smem>>) -> (i32, i32) {
    %c0_i32 = arith.constant 0 : i32
    %c0_i32_0 = arith.constant 0 : i32
    %c0_i32_1 = arith.constant 0 : i32
    return %c0_i32, %c0_i32_0 : i32, i32
  }
  func.func @transform_6(%arg0: i32, %arg1: memref<8xi32, #tpu.memory_space<smem>>) -> (i32, i32) {
    %c0_i32 = arith.constant 0 : i32
    %c0_i32_0 = arith.constant 0 : i32
    %c0_i32_1 = arith.constant 0 : i32
    return %c0_i32, %c0_i32_0 : i32, i32
  }
}

</mosaic_0001>

<llo_original>
// kernel: tpu_custom_call.1
$region0: #{tpu_custom_call.1}
  #allocation0 [shape = 'u32[]', space=smem, size = 0x4, offset = 0x4, fixed_abs, tag = 'smem constant byte address 0x4 - core index']
  #allocation1 [shape = 'u32[144,128]{1,0:T(1,128)}', space=vmem, size = 0x12000, scoped, tag = 'internal scratch']
  #allocation2 [shape = 'f32[8,128]{1,0:T(8,128)}', space=vmem, size = 0x1000, scoped, tag = 'scratch operand']
  #allocation3 [shape = 'bf16[8,128]{1,0:T(8,128)(2,1)}', space=vmem, size = 0x800, scoped, tag = 'scratch operand']
  #allocation4 [shape = 'f32[8,1]{1,0:T(8,128)}', space=vmem, size = 0x1000, scoped, tag = 'scratch operand']
  #allocation5 [shape = 'f32[8,1]{1,0:T(8,128)}', space=vmem, size = 0x1000, scoped, tag = 'scratch operand']
  #allocation6 [shape = 'f32[8,1]{1,0:T(8,128)}', space=vmem, size = 0x1000, scoped, tag = 'scratch operand']
  #allocation7 [shape = 'f32[8,1]{1,0:T(8,128)}', space=vmem, size = 0x1000, scoped, tag = 'scratch operand']
  #allocation8 [shape = 'f32[8,1]{1,0:T(8,128)}', space=vmem, size = 0x1000, scoped, tag = 'scratch operand']
  #allocation9 [shape = 's32[8]{0}', space=sflag, size = 0x20, scoped, tag = 'scratch operand']
  #allocation10 [shape = 's32[1]{0}', space=sflag, size = 0x4, scoped, tag = 'scoped memory for tpu_custom_call.1']
  #allocation11 [shape = 'u8[512]{0}', space=smem, size = 0x200, scoped, tag = 'prefetched SMEM operand 0']
  #allocation24 [shape = 's32[]', space=sflag, size = 0x4, offset = 0, fixed_abs, tag = 'sflag constant byte address 0x0 - dummy sync flag']
  #allocation25 [shape = 's32[]', space=sflag, size = 0x4, offset = 0, fixed_abs, tag = 'sflag constant byte address 0x0 - dummy sync flag']
  #allocation26 [shape = 'u32[]', space=smem, size = 0x4, offset = 0x44, fixed_abs, tag = 'smem constant byte address 0x44 - assertion arg 0']
  #allocation27 [shape = 'u32[]', space=smem, size = 0x4, offset = 0x48, fixed_abs, tag = 'smem constant byte address 0x48 - assertion arg 1']
  #allocation28 [shape = 's32[]', space=sflag, size = 0x4, offset = 0, fixed_abs, tag = 'sflag constant byte address 0x0 - dummy sync flag']
  #allocation29 [shape = 's32[]', space=sflag, size = 0x4, offset = 0, fixed_abs, tag = 'sflag constant byte address 0x0 - dummy sync flag']
  #allocation30 [shape = 's32[]', space=sflag, size = 0x4, offset = 0, fixed_abs, tag = 'sflag constant byte address 0x0 - dummy sync flag']
  #allocation31 [shape = 's32[]', space=sflag, size = 0x4, offset = 0, fixed_abs, tag = 'sflag constant byte address 0x0 - dummy sync flag']
  #allocation32 [shape = 's32[]', space=sflag, size = 0x4, offset = 0, fixed_abs, tag = 'sflag constant byte address 0x0 - dummy sync flag']
  #allocation33 [shape = 's32[]', space=sflag, size = 0x4, offset = 0, fixed_abs, tag = 'sflag constant byte address 0x0 - dummy sync flag']
  #allocation34 [shape = 's32[]', space=sflag, size = 0x4, offset = 0, fixed_abs, tag = 'sflag constant byte address 0x0 - dummy sync flag']
  #allocation35 [shape = 's32[]', space=sflag, size = 0x4, offset = 0, fixed_abs, tag = 'sflag constant byte address 0x0 - dummy sync flag']
  #allocation36 [shape = 's32[]', space=sflag, size = 0x4, offset = 0, fixed_abs, tag = 'sflag constant byte address 0x0 - dummy sync flag']
  #allocation37 [shape = 's32[]', space=sflag, size = 0x4, offset = 0, fixed_abs, tag = 'sflag constant byte address 0x0 - dummy sync flag']
  #allocation38 [shape = 's32[]', space=sflag, size = 0x4, offset = 0, fixed_abs, tag = 'sflag constant byte address 0x0 - dummy sync flag']
  #allocation39 [shape = 's32[]', space=sflag, size = 0x4, offset = 0, fixed_abs, tag = 'sflag constant byte address 0x0 - dummy sync flag']
  #allocation40 [shape = 's32[]', space=sflag, size = 0x4, offset = 0, fixed_abs, tag = 'sflag constant byte address 0x0 - dummy sync flag']
  #allocation41 [shape = 's32[]', space=sflag, size = 0x4, offset = 0, fixed_abs, tag = 'sflag constant byte address 0x0 - dummy sync flag']
  %s0 = inlined_call_operand.hbm [shape: s32[8], index: 0, kind: input, shape index: {}]
  %s1 = inlined_call_operand.hbm [shape: f32[4,8,128], index: 1, kind: input, shape index: {}]
  %s2 = inlined_call_operand.hbm [shape: f32[8,128], index: 2, kind: input, shape index: {}]
  %s3 = inlined_call_operand.hbm [shape: f32[128,128], index: 3, kind: input, shape index: {}]
  %s4 = inlined_call_operand.hbm [shape: f32[8,128], index: 4, kind: output, shape index: {0}]
  %s5 = inlined_call_operand.hbm [shape: f32[8,128], index: 5, kind: output, shape index: {1}]
  %s6 = inlined_call_operand.hbm [shape: f32[1,1], index: 6, kind: output, shape index: {2}]
  %s7 = inlined_call_operand.hbm [shape: f32[1,1], index: 7, kind: output, shape index: {3}]
  %8 = xla_tuple %s4, %s5, %s6, %s7
  %s9 = sld [smem:[#allocation0]]
  $region90: #{tpu_custom_call.1} parent=0
    _
  %s11 = ssub.s32 1, %s9
  %s12 = scalar_select 0, %s11, %s9
  %14 = dma.hbm_to_smem %s0, 16, [#allocation11], [#allocation10]
  %15 = dma.done [#allocation10], 16
  %16 = sfence
  $region1: #{tpu_custom_call.1} parent=0
    #allocation12 [shape = 'u8[4096]{0}', space=vmem, size = 0x1000, scoped, tag = 'input window, operand 2, single buffered']
    #allocation13 [shape = 's32[1]{0}', space=sflag, size = 0x4, scoped, tag = 'scoped memory for tpu_custom_call.1']
    #allocation14 [shape = 's32[1]{0}', space=sflag, size = 0x4, scoped, tag = 'scoped memory for tpu_custom_call.1']
    #allocation15 [shape = 's32[1]{0}', space=sflag, size = 0x4, scoped, tag = 'scoped memory for tpu_custom_call.1']
    #allocation16 [shape = 'u8[65536]{0}', space=vmem, size = 0x10000, scoped, tag = 'input window, operand 3, single buffered']
    #allocation17 [shape = 's32[1]{0}', space=sflag, size = 0x4, scoped, tag = 'scoped memory for tpu_custom_call.1']
    #allocation18 [shape = 'u8[4096]{0}', space=vmem, size = 0x1000, scoped, tag = 'output window, operand 0, single buffered']
    #allocation19 [shape = 'u8[4096]{0}', space=vmem, size = 0x1000, scoped, tag = 'output window, operand 1, single buffered']
    #allocation20 [shape = 's32[1]{0}', space=sflag, size = 0x4, scoped, tag = 'scoped memory for tpu_custom_call.1']
    #allocation21 [shape = 'u8[512]{0}', space=smem, size = 0x200, scoped, tag = 'output window, operand 2, single buffered']
    #allocation22 [shape = 'u8[512]{0}', space=smem, size = 0x200, scoped, tag = 'output window, operand 3, single buffered']
    #allocation23 [shape = 's32[1]{0}', space=sflag, size = 0x4, scoped, tag = 'scoped memory for tpu_custom_call.1']
    %17 = vsyncpa [#allocation13], 0
    %18 = vsyncpa [#allocation17], 0
    %19 = vsyncpa [#allocation14], 0
    %20 = vsyncpa [#allocation20], 0
    %21 = vsyncpa [#allocation15], 0
    %22 = vsyncpa [#allocation23], 0
    // Predicated region
    $region2: #{tpu_custom_call.1} parent=1 // pred_check
      _
    $region3: #{tpu_custom_call.1} parent=1 // pred_check_branch
      %24 = sbr.rel (0) target = $region5
    $region4: #{tpu_custom_call.1} parent=1 // pred_region
      %s26 = ssub.s32 128, 128
      %27 = vsyncadd [#allocation13], %s26
      %s29 = sshll.u32 [#allocation12], 4
      %s30 = int_to_ptr.vmem [resolvable:$true] %s29
      %32 = dma.hbm_to_vmem [thread:$0]  %s2, 128, %s30, [#allocation13]
    $region5: #{tpu_custom_call.1} parent=1 // pred_fallthru
      _
    // Predicated region
    $region6: #{tpu_custom_call.1} parent=1 // pred_check
      _
    $region7: #{tpu_custom_call.1} parent=1 // pred_check_branch
      %34 = sbr.rel (0) target = $region9
    $region8: #{tpu_custom_call.1} parent=1 // pred_region
      %s36 = ssub.s32 2048, 2048
      %37 = vsyncadd [#allocation17], %s36
      %s38 = sshll.u32 [#allocation16], 4
      %s39 = int_to_ptr.vmem [resolvable:$true] %s38
      %44 = dma.hbm_to_vmem [thread:$0]  %s3, 2048, %s39, [#allocation17], 128, 128, 8
    $region9: #{tpu_custom_call.1} parent=1 // pred_fallthru
      _
    // Predicated region
    $region10: #{tpu_custom_call.1} parent=1 // pred_check
      _
    $region11: #{tpu_custom_call.1} parent=1 // pred_check_branch
      %46 = sbr.rel (0) target = $region13
    $region12: #{tpu_custom_call.1} parent=1 // pred_region
      %47 = dma.done [#allocation13], 128
    $region13: #{tpu_custom_call.1} parent=1 // pred_fallthru
      _
    // Predicated region
    $region14: #{tpu_custom_call.1} parent=1 // pred_check
      _
    $region15: #{tpu_custom_call.1} parent=1 // pred_check_branch
      %49 = sbr.rel (0) target = $region17
    $region16: #{tpu_custom_call.1} parent=1 // pred_region
      %50 = dma.done [#allocation17], 2048
    $region17: #{tpu_custom_call.1} parent=1 // pred_fallthru
      _
    %p52 = scmp.eq.s32.totalorder 0, 0
    // Predicated region
    $region18: #{tpu_custom_call.1} parent=1 // pred_check
      %p53 = pneg %p52
    $region19: #{tpu_custom_call.1} parent=1 // pred_check_branch
      %55 = sbr.rel (%p53) target = $region21
    $region20: #{tpu_custom_call.1} parent=1 // pred_region
      %s56 = sld [smem:[#allocation11]]
      %s57 = smul.addr %s56, 16
      %s58 = scalar_lea.hbm %s1, %s57
      // Predicated region
      $region22: #{tpu_custom_call.1} parent=20 // pred_check
        _
      $region23: #{tpu_custom_call.1} parent=20 // pred_check_branch
        %60 = sbr.rel target = $region25
      $region24: #{tpu_custom_call.1} parent=20 // pred_region
        %61 = sst [smem:[#allocation26]] [#allocation25]
        %62 = sst [smem:[#allocation27]] [#allocation24]
      $region25: #{tpu_custom_call.1} parent=20 // pred_fallthru
        _
      %64 = shalt.err (0)
      %s66 = sshll.u32 [#allocation2], 4
      %s67 = int_to_ptr.vmem [resolvable:$true] %s66
      %69 = dma.hbm_to_vmem [thread:$0]  %s58, 16, %s67, [#allocation9]
      %s70 = sld [smem:[#allocation11 + $0x1]]
      %s71 = sadd.s32 %s70, 8
      %s72 = smul.addr %s71, 16
      %s73 = scalar_lea.hbm %s1, %s72
      %s74 = scalar_lea.vmem [#allocation2], 1
      %s75 = scalar_lea.sflag [#allocation9], 1
      // Predicated region
      $region26: #{tpu_custom_call.1} parent=20 // pred_check
        _
      $region27: #{tpu_custom_call.1} parent=20 // pred_check_branch
        %77 = sbr.rel target = $region29
      $region28: #{tpu_custom_call.1} parent=20 // pred_region
        %78 = sst [smem:[#allocation26]] [#allocation29]
        %79 = sst [smem:[#allocation27]] [#allocation28]
      $region29: #{tpu_custom_call.1} parent=20 // pred_fallthru
        _
      %81 = shalt.err (0)
      %s83 = sshll.u32 %s74, 4
      %s84 = int_to_ptr.vmem [resolvable:$true] %s83
      %86 = dma.hbm_to_vmem [thread:$0]  %s73, 16, %s84, %s75
      %s87 = sld [smem:[#allocation11 + $0x2]]
      %s88 = sadd.s32 %s87, 16
      %s89 = smul.addr %s88, 16
      %s90 = scalar_lea.hbm %s1, %s89
      %s91 = scalar_lea.vmem [#allocation2], 2
      %s92 = scalar_lea.sflag [#allocation9], 2
      // Predicated region
      $region30: #{tpu_custom_call.1} parent=20 // pred_check
        _
      $region31: #{tpu_custom_call.1} parent=20 // pred_check_branch
        %94 = sbr.rel target = $region33
      $region32: #{tpu_custom_call.1} parent=20 // pred_region
        %95 = sst [smem:[#allocation26]] [#allocation31]
        %96 = sst [smem:[#allocation27]] [#allocation30]
      $region33: #{tpu_custom_call.1} parent=20 // pred_fallthru
        _
      %98 = shalt.err (0)
      %s100 = sshll.u32 %s91, 4
      %s101 = int_to_ptr.vmem [resolvable:$true] %s100
      %103 = dma.hbm_to_vmem [thread:$0]  %s90, 16, %s101, %s92
      %s104 = sld [smem:[#allocation11 + $0x3]]
      %s105 = sadd.s32 %s104, 24
      %s106 = smul.addr %s105, 16
      %s107 = scalar_lea.hbm %s1, %s106
      %s108 = scalar_lea.vmem [#allocation2], 3
      %s109 = scalar_lea.sflag [#allocation9], 3
      // Predicated region
      $region34: #{tpu_custom_call.1} parent=20 // pred_check
        _
      $region35: #{tpu_custom_call.1} parent=20 // pred_check_branch
        %111 = sbr.rel target = $region37
      $region36: #{tpu_custom_call.1} parent=20 // pred_region
        %112 = sst [smem:[#allocation26]] [#allocation33]
        %113 = sst [smem:[#allocation27]] [#allocation32]
      $region37: #{tpu_custom_call.1} parent=20 // pred_fallthru
        _
      %115 = shalt.err (0)
      %s117 = sshll.u32 %s108, 4
      %s118 = int_to_ptr.vmem [resolvable:$true] %s117
      %120 = dma.hbm_to_vmem [thread:$0]  %s107, 16, %s118, %s109
      %s121 = sld [smem:[#allocation11 + $0x4]]
      %s122 = smul.addr %s121, 16
      %s123 = scalar_lea.hbm %s1, %s122
      %s124 = scalar_lea.vmem [#allocation2], 4
      %s125 = scalar_lea.sflag [#allocation9], 4
      // Predicated region
      $region38: #{tpu_custom_call.1} parent=20 // pred_check
        _
      $region39: #{tpu_custom_call.1} parent=20 // pred_check_branch
        %127 = sbr.rel target = $region41
      $region40: #{tpu_custom_call.1} parent=20 // pred_region
        %128 = sst [smem:[#allocation26]] [#allocation35]
        %129 = sst [smem:[#allocation27]] [#allocation34]
      $region41: #{tpu_custom_call.1} parent=20 // pred_fallthru
        _
      %131 = shalt.err (0)
      %s133 = sshll.u32 %s124, 4
      %s134 = int_to_ptr.vmem [resolvable:$true] %s133
      %136 = dma.hbm_to_vmem [thread:$0]  %s123, 16, %s134, %s125
      %s137 = sld [smem:[#allocation11 + $0x5]]
      %s138 = smul.addr %s137, 16
      %s139 = scalar_lea.hbm %s1, %s138
      %s140 = scalar_lea.vmem [#allocation2], 5
      %s141 = scalar_lea.sflag [#allocation9], 5
      // Predicated region
      $region42: #{tpu_custom_call.1} parent=20 // pred_check
        _
      $region43: #{tpu_custom_call.1} parent=20 // pred_check_branch
        %143 = sbr.rel target = $region45
      $region44: #{tpu_custom_call.1} parent=20 // pred_region
        %144 = sst [smem:[#allocation26]] [#allocation37]
        %145 = sst [smem:[#allocation27]] [#allocation36]
      $region45: #{tpu_custom_call.1} parent=20 // pred_fallthru
        _
      %147 = shalt.err (0)
      %s149 = sshll.u32 %s140, 4
      %s150 = int_to_ptr.vmem [resolvable:$true] %s149
      %152 = dma.hbm_to_vmem [thread:$0]  %s139, 16, %s150, %s141
      %s153 = sld [smem:[#allocation11 + $0x6]]
      %s154 = smul.addr %s153, 16
      %s155 = scalar_lea.hbm %s1, %s154
      %s156 = scalar_lea.vmem [#allocation2], 6
      %s157 = scalar_lea.sflag [#allocation9], 6
      // Predicated region
      $region46: #{tpu_custom_call.1} parent=20 // pred_check
        _
      $region47: #{tpu_custom_call.1} parent=20 // pred_check_branch
        %159 = sbr.rel target = $region49
      $region48: #{tpu_custom_call.1} parent=20 // pred_region
        %160 = sst [smem:[#allocation26]] [#allocation39]
        %161 = sst [smem:[#allocation27]] [#allocation38]
      $region49: #{tpu_custom_call.1} parent=20 // pred_fallthru
        _
      %163 = shalt.err (0)
      %s165 = sshll.u32 %s156, 4
      %s166 = int_to_ptr.vmem [resolvable:$true] %s165
      %168 = dma.hbm_to_vmem [thread:$0]  %s155, 16, %s166, %s157
      %s169 = sld [smem:[#allocation11 + $0x7]]
      %s170 = smul.addr %s169, 16
      %s171 = scalar_lea.hbm %s1, %s170
      %s172 = scalar_lea.vmem [#allocation2], 7
      %s173 = scalar_lea.sflag [#allocation9], 7
      // Predicated region
      $region50: #{tpu_custom_call.1} parent=20 // pred_check
        _
      $region51: #{tpu_custom_call.1} parent=20 // pred_check_branch
        %175 = sbr.rel target = $region53
      $region52: #{tpu_custom_call.1} parent=20 // pred_region
        %176 = sst [smem:[#allocation26]] [#allocation41]
        %177 = sst [smem:[#allocation27]] [#allocation40]
      $region53: #{tpu_custom_call.1} parent=20 // pred_fallthru
        _
      %179 = shalt.err (0)
      %s181 = sshll.u32 %s172, 4
      %s182 = int_to_ptr.vmem [resolvable:$true] %s181
      %184 = dma.hbm_to_vmem [thread:$0]  %s171, 16, %s182, %s173
      %s185 = smul.u32 1, 1
      %s186 = sshll.u32 %s185, 4
      %187 = dma.done [#allocation9], %s186
      %s188 = sshll.u32 %s185, 4
      %189 = dma.done %s75, %s188
      %s190 = sshll.u32 %s185, 4
      %191 = dma.done %s92, %s190
      %s192 = sshll.u32 %s185, 4
      %193 = dma.done %s109, %s192
      %s194 = sshll.u32 %s185, 4
      %195 = dma.done %s125, %s194
      %s196 = sshll.u32 %s185, 4
      %197 = dma.done %s141, %s196
      %s198 = sshll.u32 %s185, 4
      %199 = dma.done %s157, %s198
      %s200 = sshll.u32 %s185, 4
      %201 = dma.done %s173, %s200
      %v202 = vld [vmem:[#allocation2] sm:$0xff]
      %203 = vst [vmem:[#allocation18] sm:$0xff] %v202
      %v204 = vmul.f32 %v202, %v202
      %205 = vadd.xlane.f32.xlu0 %v204
      %v206 = vpop.xlane.xlu0 %205
      %v207 = vmax.f32 %v206, 1e-24
      %v208 = vrsqrt.pop %v207
      %v209 = vmul.f32 %v202, %v208
      %v210 = vpack.c.bf16 %v209, %v209
      %211 = vst [vmem:[#allocation3] sm:$0xf] %v210
      %vm212 = vcmask 7168
      %213 = vst.msk [vmem:[#allocation4] sm:$0xff] %vm212, -1e+30
      %214 = vst.msk [vmem:[#allocation5] sm:$0xff] %vm212, 0.0
      %215 = vst.msk [vmem:[#allocation6] sm:$0xff] %vm212, 0.0
      %216 = vst.msk [vmem:[#allocation7] sm:$0xff] %vm212, 0.0
      %217 = vst.msk [vmem:[#allocation8] sm:$0xff] %vm212, 0.0
    $region21: #{tpu_custom_call.1} parent=1 // pred_fallthru
      _
    %v218 = vld [vmem:[#allocation12] sm:$0xff]
    %v219 = vld [vmem:[#allocation16] sm:$0xff]
    %v220 = vld [vmem:[#allocation16 + $0x8] sm:$0xff]
    %v221 = vld [vmem:[#allocation16 + $0x10] sm:$0xff]
    %v222 = vld [vmem:[#allocation16 + $0x18] sm:$0xff]
    %v223 = vld [vmem:[#allocation16 + $0x20] sm:$0xff]
    %v224 = vld [vmem:[#allocation16 + $0x28] sm:$0xff]
    %v225 = vld [vmem:[#allocation16 + $0x30] sm:$0xff]
    %v226 = vld [vmem:[#allocation16 + $0x38] sm:$0xff]
    %v227 = vld [vmem:[#allocation16 + $0x40] sm:$0xff]
    %v228 = vld [vmem:[#allocation16 + $0x48] sm:$0xff]
    %v229 = vld [vmem:[#allocation16 + $0x50] sm:$0xff]
    %v230 = vld [vmem:[#allocation16 + $0x58] sm:$0xff]
    %v231 = vld [vmem:[#allocation16 + $0x60] sm:$0xff]
    %v232 = vld [vmem:[#allocation16 + $0x68] sm:$0xff]
    %v233 = vld [vmem:[#allocation16 + $0x70] sm:$0xff]
    %v234 = vld [vmem:[#allocation16 + $0x78] sm:$0xff]
    %v235 = vmul.f32 %v219, %v219
    %v236 = vmul.f32 %v220, %v220
    %v237 = vmul.f32 %v221, %v221
    %v238 = vmul.f32 %v222, %v222
    %v239 = vmul.f32 %v223, %v223
    %v240 = vmul.f32 %v224, %v224
    %v241 = vmul.f32 %v225, %v225
    %v242 = vmul.f32 %v226, %v226
    %v243 = vmul.f32 %v227, %v227
    %v244 = vmul.f32 %v228, %v228
    %v245 = vmul.f32 %v229, %v229
    %v246 = vmul.f32 %v230, %v230
    %v247 = vmul.f32 %v231, %v231
    %v248 = vmul.f32 %v232, %v232
    %v249 = vmul.f32 %v233, %v233
    %v250 = vmul.f32 %v234, %v234
    %v251 = vadd.f32 %v235, %v236
    %v252 = vadd.f32 %v251, %v237
    %v253 = vadd.f32 %v252, %v238
    %v254 = vadd.f32 %v253, %v239
    %v255 = vadd.f32 %v254, %v240
    %v256 = vadd.f32 %v255, %v241
    %v257 = vadd.f32 %v256, %v242
    %v258 = vadd.f32 %v257, %v243
    %v259 = vadd.f32 %v258, %v244
    %v260 = vadd.f32 %v259, %v245
    %v261 = vadd.f32 %v260, %v246
    %v262 = vadd.f32 %v261, %v247
    %v263 = vadd.f32 %v262, %v248
    %v264 = vadd.f32 %v263, %v249
    %v265 = vadd.f32 %v264, %v250
    %v266 = vrot.slane %v265, 4
    %v267 = vadd.f32 %v265, %v266
    %v268 = vrot.slane %v267, 2
    %v269 = vadd.f32 %v267, %v268
    %v270 = vrot.slane %v269, 1
    %v271 = vadd.f32 %v269, %v270
    %v272 = vmax.f32 %v271, 1e-24
    %v273 = vrsqrt.pop %v272
    %v274 = vmul.f32 %v219, %v273
    %v275 = vmul.f32 %v220, %v273
    %v276 = vmul.f32 %v221, %v273
    %v277 = vmul.f32 %v222, %v273
    %v278 = vmul.f32 %v223, %v273
    %v279 = vmul.f32 %v224, %v273
    %v280 = vmul.f32 %v225, %v273
    %v281 = vmul.f32 %v226, %v273
    %v282 = vmul.f32 %v227, %v273
    %v283 = vmul.f32 %v228, %v273
    %v284 = vmul.f32 %v229, %v273
    %v285 = vmul.f32 %v230, %v273
    %v286 = vmul.f32 %v231, %v273
    %v287 = vmul.f32 %v232, %v273
    %v288 = vmul.f32 %v233, %v273
    %v289 = vmul.f32 %v234, %v273
    %v290 = vpack.c.bf16 %v275, %v274
    %v291 = vpack.c.bf16 %v277, %v276
    %v292 = vpack.c.bf16 %v279, %v278
    %v293 = vpack.c.bf16 %v281, %v280
    %v294 = vpack.c.bf16 %v283, %v282
    %v295 = vpack.c.bf16 %v285, %v284
    %v296 = vpack.c.bf16 %v287, %v286
    %v297 = vpack.c.bf16 %v289, %v288
    %v298 = vld [vmem:[#allocation3] sm:$0xf]
    %299 = vmatprep.subr.bf16.mxu0 0
    %300 = vmatpush1.bf16.msra.mxu0 %v290
    %301 = vmatprep.subr.bf16.mxu0 0
    %302 = vmatpush1.bf16.msra.mxu0 %v291
    %303 = vmatprep.subr.bf16.mxu0 0
    %304 = vmatpush1.bf16.msra.mxu0 %v292
    %305 = vmatprep.subr.bf16.mxu0 0
    %306 = vmatpush1.bf16.msra.mxu0 %v293
    %307 = vmatprep.subr.bf16.mxu0 0
    %308 = vmatpush1.bf16.msra.mxu0 %v294
    %309 = vmatprep.subr.bf16.mxu0 0
    %310 = vmatpush1.bf16.msra.mxu0 %v295
    %311 = vmatprep.subr.bf16.mxu0 0
    %312 = vmatpush1.bf16.msra.mxu0 %v296
    %313 = vmatprep.subr.bf16.mxu0 0
    %314 = vmatpush1.bf16.msra.mxu0 %v297
    %315 = vmatprep.subr.bf16.mxu0 0
    %316 = vmatpush1.bf16.msra.mxu0 0
    %317 = vmatprep.subr.bf16.mxu0 0
    %318 = vmatpush1.bf16.msra.mxu0 0
    %319 = vmatprep.subr.bf16.mxu0 0
    %320 = vmatpush1.bf16.msra.mxu0 0
    %321 = vmatprep.subr.bf16.mxu0 0
    %322 = vmatpush1.bf16.msra.mxu0 0
    %323 = vmatprep.subr.bf16.mxu0 0
    %324 = vmatpush1.bf16.msra.mxu0 0
    %325 = vmatprep.subr.bf16.mxu0 0
    %326 = vmatpush1.bf16.msra.mxu0 0
    %327 = vmatprep.subr.bf16.mxu0 0
    %328 = vmatpush1.bf16.msra.mxu0 0
    %329 = vmatprep.subr.bf16.mxu0 0
    %330 = vmatpush1.bf16.msra.mxu0 0
    %331 = vmatprep.mubr.bf16.mxu0 0
    %332 = vmatmul.mubr.bf16.gmra.mrb[0].mxu0 %v298
    %v333 = vpop.f32.mrb[0].mxu0
    %v334 = vadd.f32 0.0, %v333
    %v335 = vpop.f32.mrb[0].mxu0
    %v336 = vpop.f32.mrb[0].mxu0
    %v337 = vpop.f32.mrb[0].mxu0
    %338 = vdwg.mxu0
    %v339 = vmul.f32 %v334, %v334
    %v340 = vsub.f32 1.0, %v339
    %v341 = vmax.f32 %v340, 0.0
    %v342 = vmin.f32 %v341, 1.0
    %v343 = vrsqrt.pop %v342
    %v344 = vmul.f32 %v342, %v343
    %vm345 = vcmp.eq.f32.partialorder %v342, inf
    %v346 = vsel %vm345, %v342, %v344
    %vm347 = vcmp.eq.f32.partialorder %v342, 0.0
    %v348 = vand.u32 %v342, 2147483648
    %v349 = vsel %vm347, %v348, %v346
    %v350 = vmul.f32 %v334, 0.87758255
    %v351 = vmul.f32 %v349, 0.47942555
    %v352 = vsub.f32 %v350, %v351
    %vm353 = vcmp.gt.f32.partialorder %v334, -0.87758255
    %v354 = vsub.f32 %v334, 0.23971277
    %v355 = vsel %vm353, %v352, %v354
    %v356 = vmul.f32 %v218, %v355
    %v357 = vsub.f32 1.0, %v218
    %v358 = vmul.f32 %v357, %v334
    %v359 = vadd.f32 %v356, %v358
    %v360 = vmul.f32 %v359, 30.0
    %361 = vst [vmem:[#allocation19] sm:$0xff] %v360
    %v362 = vld [vmem:[#allocation4] sm:$0xff]
    %363 = vmax.xlane.f32.xlu0 %v360
    %v364 = vpop.xlane.xlu0 %363
    %v365 = vmax.f32 %v362, %v364
    %v366 = vld [vmem:[#allocation5] sm:$0xff]
    %v367 = vsub.f32 %v362, %v365
    %v368 = vmul.f32 %v367, 1.442695
    %v369 = vpow.pop %v368
    %v370 = vmul.f32 %v366, %v369
    %372 = vset.pattern.permute.xlu0 0
    %373 = vperm.xlu0 %372, %v365
    %v374 = vpop.permute.xlu0 %373
    %v376 = vsub.f32 %v360, %v374
    %v377 = vmul.f32 %v376, 1.442695
    %v378 = vpow.pop %v377
    %379 = vadd.xlane.f32.xlu0 %v378
    %v380 = vpop.xlane.xlu0 %379
    %v381 = vadd.f32 %v370, %v380
    %vm382 = vcmask 7168
    %383 = vst.msk [vmem:[#allocation5] sm:$0xff] %vm382, %v381
    %384 = vst.msk [vmem:[#allocation4] sm:$0xff] %vm382, %v365
    %v385 = vld [vmem:[#allocation6] sm:$0xff]
    %v386 = vmul.f32 %v218, %v360
    %387 = vadd.xlane.f32.xlu0 %v386
    %v388 = vpop.xlane.xlu0 %387
    %v389 = vadd.f32 %v385, %v388
    %390 = vst.msk [vmem:[#allocation6] sm:$0xff] %vm382, %v389
    %v391 = vld [vmem:[#allocation7] sm:$0xff]
    %392 = vadd.xlane.f32.xlu0 %v218
    %v393 = vpop.xlane.xlu0 %392
    %v394 = vadd.f32 %v391, %v393
    %395 = vst.msk [vmem:[#allocation7] sm:$0xff] %vm382, %v394
    %v396 = vand.u32 2147483647, %v360
    %v397 = vsub.f32 0.0, %v396
    %v398 = vmul.f32 %v397, 1.442695
    %v399 = vpow.pop %v398
    %v400 = vld [vmem:[#allocation8] sm:$0xff]
    %v401 = vmax.f32 %v360, 0.0
    %v402 = vsub.f32 %v401, %v386
    %v403 = vadd.f32 %v399, 1.0
    %v404 = vlog2.pop %v403
    %v405 = vmul.f32 %v404, 0.6931472
    %v406 = vmul.f32 -0.5, %v399
    %v407 = vadd.f32 %v406, 1.0
    %v408 = vmul.f32 %v407, %v399
    %v409 = vand.u32 2147483647, %v399
    %vm410 = vcmp.lt.f32.partialorder %v409, 0.0004427343
    %v411 = vsel %vm410, %v408, %v405
    %v412 = vadd.f32 %v402, %v411
    %413 = vadd.xlane.f32.xlu0 %v412
    %v414 = vpop.xlane.xlu0 %413
    %v415 = vadd.f32 %v400, %v414
    %416 = vst.msk [vmem:[#allocation8] sm:$0xff] %vm382, %v415
    // Predicated region
    $region54: #{tpu_custom_call.1} parent=1 // pred_check
      %p417 = pneg %p52
    $region55: #{tpu_custom_call.1} parent=1 // pred_check_branch
      %419 = sbr.rel (%p417) target = $region57
    $region56: #{tpu_custom_call.1} parent=1 // pred_region
      %v420 = vlaneseq
      %v421 = vshrl.u32 %v420, 7
      %vm422 = vcmp.lt.s32.totalorder %v421, 4
      %v423 = vld [vmem:[#allocation4] sm:$0xff]
      %v424 = vld [vmem:[#allocation5] sm:$0xff]
      %v425 = vlog2.pop %v424
      %v426 = vmul.f32 %v425, 0.6931472
      %v427 = vadd.f32 %v423, %v426
      %v428 = vld [vmem:[#allocation6] sm:$0xff]
      %v429 = vsub.f32 0.0, %v428
      %v430 = vld [vmem:[#allocation7] sm:$0xff]
      %v431 = vmul.f32 %v430, %v427
      %v432 = vadd.f32 %v429, %v431
      %v433 = vsel %vm422, %v432, 0.0
      %v434 = vsel %vm382, %v433, 0.0
      %435 = vadd.xlane.f32.xlu0 %v434
      %v436 = vpop.xlane.xlu0 %435
      %v437 = vrot.slane %v436, 4
      %v438 = vadd.f32 %v436, %v437
      %v439 = vrot.slane %v438, 2
      %v440 = vadd.f32 %v438, %v439
      %v441 = vrot.slane %v440, 1
      %v442 = vadd.f32 %v440, %v441
      %s443 = vtos %v442
      %v444 = vld [vmem:[#allocation8] sm:$0xff]
      %v445 = vsel %vm422, %v444, 0.0
      %v446 = vsel %vm382, %v445, 0.0
      %447 = vadd.xlane.f32.xlu0 %v446
      %v448 = vpop.xlane.xlu0 %447
      %v449 = vrot.slane %v448, 4
      %v450 = vadd.f32 %v448, %v449
      %v451 = vrot.slane %v450, 2
      %v452 = vadd.f32 %v450, %v451
      %v453 = vrot.slane %v452, 1
      %v454 = vadd.f32 %v452, %v453
      %s455 = vtos %v454
      %s456 = smul.f32 %s443, 0.25
      %s457 = scalar_lea.smem [#allocation21], 0
      %458 = sst [smem:[%s457]] %s456
      %s459 = smul.f32 %s455, 0.001953125
      %s460 = scalar_lea.smem [#allocation22], 0
      %461 = sst [smem:[%s460]] %s459
    $region57: #{tpu_custom_call.1} parent=1 // pred_fallthru
      _
    // Predicated region
    $region58: #{tpu_custom_call.1} parent=1 // pred_check
      _
    $region59: #{tpu_custom_call.1} parent=1 // pred_check_branch
      %463 = sbr.rel (0) target = $region61
    $region60: #{tpu_custom_call.1} parent=1 // pred_region
      %s465 = ssub.s32 128, 128
      %466 = vsyncadd [#allocation14], %s465
      %s468 = sshll.u32 [#allocation18], 4
      %s469 = int_to_ptr.vmem [resolvable:$true] %s468
      %471 = dma.vmem_to_hbm [thread:$0]  %s469, 128, %s4, [#allocation14]
    $region61: #{tpu_custom_call.1} parent=1 // pred_fallthru
      _
    // Predicated region
    $region62: #{tpu_custom_call.1} parent=1 // pred_check
      _
    $region63: #{tpu_custom_call.1} parent=1 // pred_check_branch
      %473 = sbr.rel (0) target = $region65
    $region64: #{tpu_custom_call.1} parent=1 // pred_region
      %s475 = ssub.s32 128, 128
      %476 = vsyncadd [#allocation20], %s475
      %s478 = sshll.u32 [#allocation19], 4
      %s479 = int_to_ptr.vmem [resolvable:$true] %s478
      %481 = dma.vmem_to_hbm [thread:$0]  %s479, 128, %s5, [#allocation20]
    $region65: #{tpu_custom_call.1} parent=1 // pred_fallthru
      _
    // Predicated region
    $region66: #{tpu_custom_call.1} parent=1 // pred_check
      _
    $region67: #{tpu_custom_call.1} parent=1 // pred_check_branch
      %483 = sbr.rel (0) target = $region69
    $region68: #{tpu_custom_call.1} parent=1 // pred_region
      %s485 = ssub.s32 16, 16
      %486 = vsyncadd [#allocation15], %s485
      %489 = dma.smem_to_hbm [#allocation21], 16, %s6, [#allocation15]
    $region69: #{tpu_custom_call.1} parent=1 // pred_fallthru
      _
    // Predicated region
    $region70: #{tpu_custom_call.1} parent=1 // pred_check
      _
    $region71: #{tpu_custom_call.1} parent=1 // pred_check_branch
      %491 = sbr.rel (0) target = $region73
    $region72: #{tpu_custom_call.1} parent=1 // pred_region
      %s493 = ssub.s32 16, 16
      %494 = vsyncadd [#allocation23], %s493
      %497 = dma.smem_to_hbm [#allocation22], 16, %s7, [#allocation23]
    $region73: #{tpu_custom_call.1} parent=1 // pred_fallthru
      _
    // Predicated region
    $region74: #{tpu_custom_call.1} parent=1 // pred_check
      _
    $region75: #{tpu_custom_call.1} parent=1 // pred_check_branch
      %499 = sbr.rel (0) target = $region77
    $region76: #{tpu_custom_call.1} parent=1 // pred_region
      %500 = dma.done [#allocation14], 128
    $region77: #{tpu_custom_call.1} parent=1 // pred_fallthru
      _
    // Predicated region
    $region78: #{tpu_custom_call.1} parent=1 // pred_check
      _
    $region79: #{tpu_custom_call.1} parent=1 // pred_check_branch
      %502 = sbr.rel (0) target = $region81
    $region80: #{tpu_custom_call.1} parent=1 // pred_region
      %503 = dma.done [#allocation20], 128
    $region81: #{tpu_custom_call.1} parent=1 // pred_fallthru
      _
    // Predicated region
    $region82: #{tpu_custom_call.1} parent=1 // pred_check
      _
    $region83: #{tpu_custom_call.1} parent=1 // pred_check_branch
      %505 = sbr.rel (0) target = $region85
    $region84: #{tpu_custom_call.1} parent=1 // pred_region
      %506 = dma.done [#allocation15], 16
    $region85: #{tpu_custom_call.1} parent=1 // pred_fallthru
      _
    // Predicated region
    $region86: #{tpu_custom_call.1} parent=1 // pred_check
      _
    $region87: #{tpu_custom_call.1} parent=1 // pred_check_branch
      %508 = sbr.rel (0) target = $region89
    $region88: #{tpu_custom_call.1} parent=1 // pred_region
      %509 = dma.done [#allocation23], 16
    $region89: #{tpu_custom_call.1} parent=1 // pred_fallthru
      _
    %510 = sfence
    %511 = vsyncpa [#allocation13], 1
    %512 = vsyncpa [#allocation17], 1
    %513 = vsyncpa [#allocation14], 1
    %514 = vsyncpa [#allocation20], 1
    %515 = vsyncpa [#allocation15], 1
    %516 = vsyncpa [#allocation23], 1
  %517 = vsyncmov [#allocation9]
  %s518 = vpop.sfrf %517
  %p519 = scmp.eq.s32.totalorder %s518, 0
  %p520 = pneg %p519
  %522 = shalt.err (%p520)
  %s523 = scalar_lea.sflag [#allocation9], 1
  %524 = vsyncmov %s523
  %s525 = vpop.sfrf %524
  %p526 = scmp.eq.s32.totalorder %s525, 0
  %p527 = pneg %p526
  %529 = shalt.err (%p527)
  %s530 = scalar_lea.sflag [#allocation9], 2
  %531 = vsyncmov %s530
  %s532 = vpop.sfrf %531
  %p533 = scmp.eq.s32.totalorder %s532, 0
  %p534 = pneg %p533
  %536 = shalt.err (%p534)
  %s537 = scalar_lea.sflag [#allocation9], 3
  %538 = vsyncmov %s537
  %s539 = vpop.sfrf %538
  %p540 = scmp.eq.s32.totalorder %s539, 0
  %p541 = pneg %p540
  %543 = shalt.err (%p541)
  %s544 = scalar_lea.sflag [#allocation9], 4
  %545 = vsyncmov %s544
  %s546 = vpop.sfrf %545
  %p547 = scmp.eq.s32.totalorder %s546, 0
  %p548 = pneg %p547
  %550 = shalt.err (%p548)
  %s551 = scalar_lea.sflag [#allocation9], 5
  %552 = vsyncmov %s551
  %s553 = vpop.sfrf %552
  %p554 = scmp.eq.s32.totalorder %s553, 0
  %p555 = pneg %p554
  %557 = shalt.err (%p555)
  %s558 = scalar_lea.sflag [#allocation9], 6
  %559 = vsyncmov %s558
  %s560 = vpop.sfrf %559
  %p561 = scmp.eq.s32.totalorder %s560, 0
  %p562 = pneg %p561
  %564 = shalt.err (%p562)
  %s565 = scalar_lea.sflag [#allocation9], 7
  %566 = vsyncmov %s565
  %s567 = vpop.sfrf %566
  %p568 = scmp.eq.s32.totalorder %s567, 0
  %p569 = pneg %p568
  %571 = shalt.err (%p569)

</llo_original>
